<compile_context>
chip_gen: v7x
topology: tpu7x:2x2x1
jax: 0.10.0
libtpu: 0.0.40
codegen_flags: <defaults>
</compile_context>

<pallas_src>
import functools

import jax
import jax.numpy as jnp
from jax.experimental import pallas as pl
from jax.experimental.pallas import tpu as pltpu


# Encoder: n -> 64 -> 32 -> 16 -> 8 -> 4   (ReLU after all but the last)
# Decoder: 4 -> 8 -> 16 -> 32 -> 64 -> n   (ReLU after all but the last)
def _layer_dims(n_pixels):
    return [
        (n_pixels, 64), (64, 32), (32, 16), (16, 8), (8, 4),   # encoder
        (4, 8), (8, 16), (16, 32), (32, 64), (64, n_pixels),   # decoder
    ]


def _cdiv(a, b):
    return (a + b - 1) // b


def _round_up(x, m):
    return _cdiv(x, m) * m


def _ae1_kernel(x_ref, *refs):
    """One batch tile through the whole (fused, 9-layer) autoencoder."""
    n_layers = (len(refs) - 1) // 2
    ws = refs[:n_layers]
    bs = refs[n_layers:2 * n_layers]
    o_ref = refs[2 * n_layers]

    h = x_ref[...]
    if h.dtype != jnp.float32:
        h = h.astype(jnp.float32)          # cast once; all math stays f32

    for i in range(n_layers):
        h = jnp.dot(h, ws[i][...], preferred_element_type=jnp.float32) + bs[i][...]
        if i != n_layers - 1:              # ReLU after every fused layer but the last
            h = jnp.maximum(h, 0.0)

    o_ref[...] = h.astype(o_ref.dtype)


def _choose_block_m(B, n_pixels, requested, param_bytes):
    """Batch-tile size: VMEM-bounded, with enough grid steps for pipelining."""
    n_lanes = _round_up(n_pixels, 128)     # VMEM lane footprint of one row

    def vmem_est(bm):
        act = bm * n_lanes * 4
        # x + out double-buffered by the pipeline, ~2 f32 in-kernel temporaries
        # (widest intermediate + pre-store result), params counted twice.
        return 6 * act + 2 * param_bytes

    if B <= 8:
        return B                           # full-dim block, always layout-legal

    bm = min(_round_up(requested, 8), _round_up(B, 8))
    budget = 36 * 1024 * 1024              # headroom under v7x's 64 MiB per-TC VMEM
    while bm > 8 and vmem_est(bm) > budget:
        bm = max(8, _round_up(bm // 2, 8))
    if bm >= B:
        bm = B                             # single full-dim block

    # Guarantee several grid steps when the batch allows it: DMA/compute
    # overlap on all chips and both TensorCores on v7x ("parallel" axis).
    min_steps = 4 if B >= 64 else (2 if B >= 16 else 1)
    if _cdiv(B, bm) < min_steps:
        bm = max(8, _round_up(_cdiv(B, min_steps), 8))
    return bm


@functools.partial(jax.jit, static_argnames=("block_m", "io_bf16"))
def _ae1_forward_impl(x, weights, biases, *, block_m, io_bf16):
    B, n_pixels = x.shape

    # Fuse layers 4 and 5 (no ReLU between encoder output and decoder input):
    # h5 = (h3 W4 + b4) W5 + b5 = h3 (W4 W5) + (b4 W5 + b5).
    w45 = jnp.dot(weights[4], weights[5], preferred_element_type=jnp.float32)
    b45 = jnp.dot(biases[4], weights[5], preferred_element_type=jnp.float32) + biases[5]
    ws = tuple(weights[:4]) + (w45,) + tuple(weights[6:])
    bs = tuple(biases[:4]) + (b45,) + tuple(biases[6:])

    io_dtype = jnp.bfloat16 if io_bf16 else jnp.float32
    if x.dtype != io_dtype:
        x = x.astype(io_dtype)

    grid = (_cdiv(B, block_m),)

    x_spec = pl.BlockSpec((block_m, n_pixels), lambda i: (i, 0))
    out_spec = pl.BlockSpec((block_m, n_pixels), lambda i: (i, 0))
    # Block-invariant params: full-shape blocks, constant index map.
    w_specs = [pl.BlockSpec(w.shape, lambda i: (0, 0)) for w in ws]
    b_specs = [pl.BlockSpec(b.shape, lambda i: (0, 0)) for b in bs]

    param_bytes = (sum(w.size * w.dtype.itemsize for w in ws)
                   + sum(b.size * b.dtype.itemsize for b in bs))
    flops = 2 * B * sum(int(w.shape[0]) * int(w.shape[1]) for w in ws)
    bytes_accessed = (x.size * x.dtype.itemsize
                      + B * n_pixels * jnp.dtype(io_dtype).itemsize
                      + param_bytes)

    call = pl.pallas_call(
        _ae1_kernel,
        out_shape=jax.ShapeDtypeStruct((B, n_pixels), io_dtype),
        grid_spec=pltpu.PrefetchScalarGridSpec(
            num_scalar_prefetch=0,
            grid=grid,
            in_specs=[x_spec] + w_specs + b_specs,
            out_specs=out_spec,
        ),
        compiler_params=pltpu.CompilerParams(
            dimension_semantics=("parallel",),
            vmem_limit_bytes=48 * 1024 * 1024,
        ),
        cost_estimate=pl.CostEstimate(
            flops=flops, transcendentals=0, bytes_accessed=bytes_accessed),
    )
    return call(x, *ws, *bs)


def ae1_forward(x, weights, biases, *, block_m=512, io_bf16=False):
    """AE_1 forward: y = decoder(encoder(x)). x: (B, n_pixels) -> (B, n_pixels)."""
    B, n_pixels = x.shape
    param_bytes = (sum(w.size * w.dtype.itemsize for w in weights)
                   + sum(b.size * b.dtype.itemsize for b in biases))
    bm = _choose_block_m(B, n_pixels, block_m, param_bytes)
    return _ae1_forward_impl(x, tuple(weights), tuple(biases),
                             block_m=bm, io_bf16=io_bf16)


def init_params(key, n_pixels):
    """PyTorch-style init: U(-1/sqrt(fan_in), 1/sqrt(fan_in)); W as (in, out)."""
    weights, biases = [], []
    for (din, dout) in _layer_dims(n_pixels):
        key, kw, kb = jax.random.split(key, 3)
        bound = 1.0 / jnp.sqrt(jnp.float32(din))
        weights.append(jax.random.uniform(kw, (din, dout), jnp.float32,
                                          minval=-bound, maxval=bound))
        biases.append(jax.random.uniform(kb, (1, dout), jnp.float32,
                                         minval=-bound, maxval=bound))
    return weights, biases


def ae1_reference(x, weights, biases):
    h = x
    for i in range(10):
        h = h @ weights[i] + biases[i]
        if i not in (4, 9):                # no ReLU after encoder output / final layer
            h = jnp.maximum(h, 0.0)
    return h


if __name__ == "__main__":
    # n_pixels deliberately NOT a multiple of 128 (exercises the ragged lane
    # tail in-kernel, no wrapper padding). Small batch keeps the demo fast.
    n_pixels = 200
    batch = 16

    key = jax.random.PRNGKey(0)
    key, kx = jax.random.split(key)
    x = jax.random.normal(kx, (batch, n_pixels), dtype=jnp.float32)
    weights, biases = init_params(key, n_pixels)

    ref = ae1_reference(x, weights, biases)

    # f32 path (strict check).
    out = jax.block_until_ready(ae1_forward(x, weights, biases))
    assert out.shape == (batch, n_pixels)
    assert out.dtype == jnp.float32
    assert jnp.allclose(out, ref, atol=1e-4, rtol=1e-4), "f32 mismatch vs reference"

    # Ragged batch: grid = cdiv(B, block_m) with a partial tail tile (no padding).
    x2 = x[:13]
    out2 = jax.block_until_ready(ae1_forward(x2, weights, biases, block_m=8))
    assert out2.shape == (13, n_pixels)
    assert jnp.allclose(out2, ref[:13], atol=1e-4, rtol=1e-4), "ragged-batch mismatch"

    # bf16 activation streaming (halves HBM traffic on x/out; math stays f32).
    out_bf16 = jax.block_until_ready(ae1_forward(x, weights, biases, io_bf16=True))
    assert out_bf16.shape == (batch, n_pixels)
    assert jnp.allclose(out_bf16.astype(jnp.float32), ref,
                        atol=2e-1, rtol=1e-1), "bf16 I/O mismatch vs reference"

    print("KERNEL_OK")
</pallas_src>

<mosaic_0001>
module attributes {stable_mosaic.version = 11 : i64} {
  func.func @_ae1_kernel(%arg0: i32, %arg1: memref<8x200xf32, #tpu.memory_space<vmem>>, %arg2: memref<200x64xf32, #tpu.memory_space<vmem>>, %arg3: memref<64x32xf32, #tpu.memory_space<vmem>>, %arg4: memref<32x16xf32, #tpu.memory_space<vmem>>, %arg5: memref<16x8xf32, #tpu.memory_space<vmem>>, %arg6: memref<8x8xf32, #tpu.memory_space<vmem>>, %arg7: memref<8x16xf32, #tpu.memory_space<vmem>>, %arg8: memref<16x32xf32, #tpu.memory_space<vmem>>, %arg9: memref<32x64xf32, #tpu.memory_space<vmem>>, %arg10: memref<64x200xf32, #tpu.memory_space<vmem>>, %arg11: memref<1x64xf32, #tpu.memory_space<vmem>>, %arg12: memref<1x32xf32, #tpu.memory_space<vmem>>, %arg13: memref<1x16xf32, #tpu.memory_space<vmem>>, %arg14: memref<1x8xf32, #tpu.memory_space<vmem>>, %arg15: memref<1x8xf32, #tpu.memory_space<vmem>>, %arg16: memref<1x16xf32, #tpu.memory_space<vmem>>, %arg17: memref<1x32xf32, #tpu.memory_space<vmem>>, %arg18: memref<1x64xf32, #tpu.memory_space<vmem>>, %arg19: memref<1x200xf32, #tpu.memory_space<vmem>>, %arg20: memref<8x200xf32, #tpu.memory_space<vmem>>) attributes {dimension_semantics = [#tpu.dimension_semantics<parallel>], iteration_bounds = array<i64: 2>, scalar_prefetch = 0 : i64, scratch_operands = 0 : i64, tpu.core_type = #tpu.core_type<tc>, window_params = [{transform_indices = @transform_0, window_bounds = array<i64: 8, 200>}, {pipeline_mode = #tpu.pipeline_mode<synchronous>, transform_indices = @transform_1, window_bounds = array<i64: 200, 64>}, {pipeline_mode = #tpu.pipeline_mode<synchronous>, transform_indices = @transform_2, window_bounds = array<i64: 64, 32>}, {pipeline_mode = #tpu.pipeline_mode<synchronous>, transform_indices = @transform_3, window_bounds = array<i64: 32, 16>}, {pipeline_mode = #tpu.pipeline_mode<synchronous>, transform_indices = @transform_4, window_bounds = array<i64: 16, 8>}, {pipeline_mode = #tpu.pipeline_mode<synchronous>, transform_indices = @transform_5, window_bounds = array<i64: 8, 8>}, {pipeline_mode = #tpu.pipeline_mode<synchronous>, transform_indices = @transform_6, window_bounds = array<i64: 8, 16>}, {pipeline_mode = #tpu.pipeline_mode<synchronous>, transform_indices = @transform_7, window_bounds = array<i64: 16, 32>}, {pipeline_mode = #tpu.pipeline_mode<synchronous>, transform_indices = @transform_8, window_bounds = array<i64: 32, 64>}, {pipeline_mode = #tpu.pipeline_mode<synchronous>, transform_indices = @transform_9, window_bounds = array<i64: 64, 200>}, {pipeline_mode = #tpu.pipeline_mode<synchronous>, transform_indices = @transform_10, window_bounds = array<i64: 1, 64>}, {pipeline_mode = #tpu.pipeline_mode<synchronous>, transform_indices = @transform_11, window_bounds = array<i64: 1, 32>}, {pipeline_mode = #tpu.pipeline_mode<synchronous>, transform_indices = @transform_12, window_bounds = array<i64: 1, 16>}, {pipeline_mode = #tpu.pipeline_mode<synchronous>, transform_indices = @transform_13, window_bounds = array<i64: 1, 8>}, {pipeline_mode = #tpu.pipeline_mode<synchronous>, transform_indices = @transform_14, window_bounds = array<i64: 1, 8>}, {pipeline_mode = #tpu.pipeline_mode<synchronous>, transform_indices = @transform_15, window_bounds = array<i64: 1, 16>}, {pipeline_mode = #tpu.pipeline_mode<synchronous>, transform_indices = @transform_16, window_bounds = array<i64: 1, 32>}, {pipeline_mode = #tpu.pipeline_mode<synchronous>, transform_indices = @transform_17, window_bounds = array<i64: 1, 64>}, {pipeline_mode = #tpu.pipeline_mode<synchronous>, transform_indices = @transform_18, window_bounds = array<i64: 1, 200>}, {transform_indices = @transform_19, window_bounds = array<i64: 8, 200>}]} {
    %c0 = arith.constant 0 : index
    %c0_0 = arith.constant 0 : index
    %0 = vector.load %arg1[%c0, %c0_0] : memref<8x200xf32, #tpu.memory_space<vmem>>, vector<8x200xf32>
    %c0_1 = arith.constant 0 : index
    %c0_2 = arith.constant 0 : index
    %1 = vector.load %arg2[%c0_1, %c0_2] : memref<200x64xf32, #tpu.memory_space<vmem>>, vector<200x64xf32>
    %cst = arith.constant dense<0.000000e+00> : vector<8x64xf32>
    %2 = tpu.matmul %0, %1, %cst {dimension_numbers = #tpu.dot_dimension_numbers<[1], [0], [0], [1], [0, 0, 1, 1], [], []>} : vector<8x200xf32>, vector<200x64xf32>, vector<8x64xf32> -> vector<8x64xf32>
    %c0_3 = arith.constant 0 : index
    %c0_4 = arith.constant 0 : index
    %3 = vector.load %arg11[%c0_3, %c0_4] : memref<1x64xf32, #tpu.memory_space<vmem>>, vector<1x64xf32>
    %4 = vector.broadcast %3 : vector<1x64xf32> to vector<8x64xf32>
    %5 = arith.addf %2, %4 : vector<8x64xf32>
    %cst_5 = arith.constant 0.000000e+00 : f32
    %6 = vector.broadcast %cst_5 : f32 to vector<8x64xf32>
    %7 = arith.maximumf %5, %6 : vector<8x64xf32>
    %c0_6 = arith.constant 0 : index
    %c0_7 = arith.constant 0 : index
    %8 = vector.load %arg3[%c0_6, %c0_7] : memref<64x32xf32, #tpu.memory_space<vmem>>, vector<64x32xf32>
    %cst_8 = arith.constant dense<0.000000e+00> : vector<8x32xf32>
    %9 = tpu.matmul %7, %8, %cst_8 {dimension_numbers = #tpu.dot_dimension_numbers<[1], [0], [0], [1], [0, 0, 1, 1], [], []>} : vector<8x64xf32>, vector<64x32xf32>, vector<8x32xf32> -> vector<8x32xf32>
    %c0_9 = arith.constant 0 : index
    %c0_10 = arith.constant 0 : index
    %10 = vector.load %arg12[%c0_9, %c0_10] : memref<1x32xf32, #tpu.memory_space<vmem>>, vector<1x32xf32>
    %11 = vector.broadcast %10 : vector<1x32xf32> to vector<8x32xf32>
    %12 = arith.addf %9, %11 : vector<8x32xf32>
    %cst_11 = arith.constant 0.000000e+00 : f32
    %13 = vector.broadcast %cst_11 : f32 to vector<8x32xf32>
    %14 = arith.maximumf %12, %13 : vector<8x32xf32>
    %c0_12 = arith.constant 0 : index
    %c0_13 = arith.constant 0 : index
    %15 = vector.load %arg4[%c0_12, %c0_13] : memref<32x16xf32, #tpu.memory_space<vmem>>, vector<32x16xf32>
    %cst_14 = arith.constant dense<0.000000e+00> : vector<8x16xf32>
    %16 = tpu.matmul %14, %15, %cst_14 {dimension_numbers = #tpu.dot_dimension_numbers<[1], [0], [0], [1], [0, 0, 1, 1], [], []>} : vector<8x32xf32>, vector<32x16xf32>, vector<8x16xf32> -> vector<8x16xf32>
    %c0_15 = arith.constant 0 : index
    %c0_16 = arith.constant 0 : index
    %17 = vector.load %arg13[%c0_15, %c0_16] : memref<1x16xf32, #tpu.memory_space<vmem>>, vector<1x16xf32>
    %18 = vector.broadcast %17 : vector<1x16xf32> to vector<8x16xf32>
    %19 = arith.addf %16, %18 : vector<8x16xf32>
    %cst_17 = arith.constant 0.000000e+00 : f32
    %20 = vector.broadcast %cst_17 : f32 to vector<8x16xf32>
    %21 = arith.maximumf %19, %20 : vector<8x16xf32>
    %c0_18 = arith.constant 0 : index
    %c0_19 = arith.constant 0 : index
    %22 = vector.load %arg5[%c0_18, %c0_19] : memref<16x8xf32, #tpu.memory_space<vmem>>, vector<16x8xf32>
    %cst_20 = arith.constant dense<0.000000e+00> : vector<8x8xf32>
    %23 = tpu.matmul %21, %22, %cst_20 {dimension_numbers = #tpu.dot_dimension_numbers<[1], [0], [0], [1], [0, 0, 1, 1], [], []>} : vector<8x16xf32>, vector<16x8xf32>, vector<8x8xf32> -> vector<8x8xf32>
    %c0_21 = arith.constant 0 : index
    %c0_22 = arith.constant 0 : index
    %24 = vector.load %arg14[%c0_21, %c0_22] : memref<1x8xf32, #tpu.memory_space<vmem>>, vector<1x8xf32>
    %25 = vector.broadcast %24 : vector<1x8xf32> to vector<8x8xf32>
    %26 = arith.addf %23, %25 : vector<8x8xf32>
    %cst_23 = arith.constant 0.000000e+00 : f32
    %27 = vector.broadcast %cst_23 : f32 to vector<8x8xf32>
    %28 = arith.maximumf %26, %27 : vector<8x8xf32>
    %c0_24 = arith.constant 0 : index
    %c0_25 = arith.constant 0 : index
    %29 = vector.load %arg6[%c0_24, %c0_25] : memref<8x8xf32, #tpu.memory_space<vmem>>, vector<8x8xf32>
    %cst_26 = arith.constant dense<0.000000e+00> : vector<8x8xf32>
    %30 = tpu.matmul %28, %29, %cst_26 {dimension_numbers = #tpu.dot_dimension_numbers<[1], [0], [0], [1], [0, 0, 1, 1], [], []>} : vector<8x8xf32>, vector<8x8xf32>, vector<8x8xf32> -> vector<8x8xf32>
    %c0_27 = arith.constant 0 : index
    %c0_28 = arith.constant 0 : index
    %31 = vector.load %arg15[%c0_27, %c0_28] : memref<1x8xf32, #tpu.memory_space<vmem>>, vector<1x8xf32>
    %32 = vector.broadcast %31 : vector<1x8xf32> to vector<8x8xf32>
    %33 = arith.addf %30, %32 : vector<8x8xf32>
    %cst_29 = arith.constant 0.000000e+00 : f32
    %34 = vector.broadcast %cst_29 : f32 to vector<8x8xf32>
    %35 = arith.maximumf %33, %34 : vector<8x8xf32>
    %c0_30 = arith.constant 0 : index
    %c0_31 = arith.constant 0 : index
    %36 = vector.load %arg7[%c0_30, %c0_31] : memref<8x16xf32, #tpu.memory_space<vmem>>, vector<8x16xf32>
    %cst_32 = arith.constant dense<0.000000e+00> : vector<8x16xf32>
    %37 = tpu.matmul %35, %36, %cst_32 {dimension_numbers = #tpu.dot_dimension_numbers<[1], [0], [0], [1], [0, 0, 1, 1], [], []>} : vector<8x8xf32>, vector<8x16xf32>, vector<8x16xf32> -> vector<8x16xf32>
    %c0_33 = arith.constant 0 : index
    %c0_34 = arith.constant 0 : index
    %38 = vector.load %arg16[%c0_33, %c0_34] : memref<1x16xf32, #tpu.memory_space<vmem>>, vector<1x16xf32>
    %39 = vector.broadcast %38 : vector<1x16xf32> to vector<8x16xf32>
    %40 = arith.addf %37, %39 : vector<8x16xf32>
    %cst_35 = arith.constant 0.000000e+00 : f32
    %41 = vector.broadcast %cst_35 : f32 to vector<8x16xf32>
    %42 = arith.maximumf %40, %41 : vector<8x16xf32>
    %c0_36 = arith.constant 0 : index
    %c0_37 = arith.constant 0 : index
    %43 = vector.load %arg8[%c0_36, %c0_37] : memref<16x32xf32, #tpu.memory_space<vmem>>, vector<16x32xf32>
    %cst_38 = arith.constant dense<0.000000e+00> : vector<8x32xf32>
    %44 = tpu.matmul %42, %43, %cst_38 {dimension_numbers = #tpu.dot_dimension_numbers<[1], [0], [0], [1], [0, 0, 1, 1], [], []>} : vector<8x16xf32>, vector<16x32xf32>, vector<8x32xf32> -> vector<8x32xf32>
    %c0_39 = arith.constant 0 : index
    %c0_40 = arith.constant 0 : index
    %45 = vector.load %arg17[%c0_39, %c0_40] : memref<1x32xf32, #tpu.memory_space<vmem>>, vector<1x32xf32>
    %46 = vector.broadcast %45 : vector<1x32xf32> to vector<8x32xf32>
    %47 = arith.addf %44, %46 : vector<8x32xf32>
    %cst_41 = arith.constant 0.000000e+00 : f32
    %48 = vector.broadcast %cst_41 : f32 to vector<8x32xf32>
    %49 = arith.maximumf %47, %48 : vector<8x32xf32>
    %c0_42 = arith.constant 0 : index
    %c0_43 = arith.constant 0 : index
    %50 = vector.load %arg9[%c0_42, %c0_43] : memref<32x64xf32, #tpu.memory_space<vmem>>, vector<32x64xf32>
    %cst_44 = arith.constant dense<0.000000e+00> : vector<8x64xf32>
    %51 = tpu.matmul %49, %50, %cst_44 {dimension_numbers = #tpu.dot_dimension_numbers<[1], [0], [0], [1], [0, 0, 1, 1], [], []>} : vector<8x32xf32>, vector<32x64xf32>, vector<8x64xf32> -> vector<8x64xf32>
    %c0_45 = arith.constant 0 : index
    %c0_46 = arith.constant 0 : index
    %52 = vector.load %arg18[%c0_45, %c0_46] : memref<1x64xf32, #tpu.memory_space<vmem>>, vector<1x64xf32>
    %53 = vector.broadcast %52 : vector<1x64xf32> to vector<8x64xf32>
    %54 = arith.addf %51, %53 : vector<8x64xf32>
    %cst_47 = arith.constant 0.000000e+00 : f32
    %55 = vector.broadcast %cst_47 : f32 to vector<8x64xf32>
    %56 = arith.maximumf %54, %55 : vector<8x64xf32>
    %c0_48 = arith.constant 0 : index
    %c0_49 = arith.constant 0 : index
    %57 = vector.load %arg10[%c0_48, %c0_49] : memref<64x200xf32, #tpu.memory_space<vmem>>, vector<64x200xf32>
    %cst_50 = arith.constant dense<0.000000e+00> : vector<8x200xf32>
    %58 = tpu.matmul %56, %57, %cst_50 {dimension_numbers = #tpu.dot_dimension_numbers<[1], [0], [0], [1], [0, 0, 1, 1], [], []>} : vector<8x64xf32>, vector<64x200xf32>, vector<8x200xf32> -> vector<8x200xf32>
    %c0_51 = arith.constant 0 : index
    %c0_52 = arith.constant 0 : index
    %59 = vector.load %arg19[%c0_51, %c0_52] : memref<1x200xf32, #tpu.memory_space<vmem>>, vector<1x200xf32>
    %60 = vector.broadcast %59 : vector<1x200xf32> to vector<8x200xf32>
    %61 = arith.addf %58, %60 : vector<8x200xf32>
    %c0_53 = arith.constant 0 : index
    %c0_54 = arith.constant 0 : index
    %62 = vector.load %arg20[%c0_53, %c0_54] : memref<8x200xf32, #tpu.memory_space<vmem>>, vector<8x200xf32>
    tpu.vector_store %arg20[%c0_53, %c0_54], %61 {strides = array<i32>} : memref<8x200xf32, #tpu.memory_space<vmem>>, vector<8x200xf32>,
    return
  }
  func.func @transform_0(%arg0: i32) -> (i32, i32) {
    %c0_i32 = arith.constant 0 : i32
    %c0_i32_0 = arith.constant 0 : i32
    return %arg0, %c0_i32 : i32, i32
  }
  func.func @transform_1(%arg0: i32) -> (i32, i32) {
    %c0_i32 = arith.constant 0 : i32
    %c0_i32_0 = arith.constant 0 : i32
    %c0_i32_1 = arith.constant 0 : i32
    return %c0_i32, %c0_i32_0 : i32, i32
  }
  func.func @transform_2(%arg0: i32) -> (i32, i32) {
    %c0_i32 = arith.constant 0 : i32
    %c0_i32_0 = arith.constant 0 : i32
    %c0_i32_1 = arith.constant 0 : i32
    return %c0_i32, %c0_i32_0 : i32, i32
  }
  func.func @transform_3(%arg0: i32) -> (i32, i32) {
    %c0_i32 = arith.constant 0 : i32
    %c0_i32_0 = arith.constant 0 : i32
    %c0_i32_1 = arith.constant 0 : i32
    return %c0_i32, %c0_i32_0 : i32, i32
  }
  func.func @transform_4(%arg0: i32) -> (i32, i32) {
    %c0_i32 = arith.constant 0 : i32
    %c0_i32_0 = arith.constant 0 : i32
    %c0_i32_1 = arith.constant 0 : i32
    return %c0_i32, %c0_i32_0 : i32, i32
  }
  func.func @transform_5(%arg0: i32) -> (i32, i32) {
    %c0_i32 = arith.constant 0 : i32
    %c0_i32_0 = arith.constant 0 : i32
    %c0_i32_1 = arith.constant 0 : i32
    return %c0_i32, %c0_i32_0 : i32, i32
  }
  func.func @transform_6(%arg0: i32) -> (i32, i32) {
    %c0_i32 = arith.constant 0 : i32
    %c0_i32_0 = arith.constant 0 : i32
    %c0_i32_1 = arith.constant 0 : i32
    return %c0_i32, %c0_i32_0 : i32, i32
  }
  func.func @transform_7(%arg0: i32) -> (i32, i32) {
    %c0_i32 = arith.constant 0 : i32
    %c0_i32_0 = arith.constant 0 : i32
    %c0_i32_1 = arith.constant 0 : i32
    return %c0_i32, %c0_i32_0 : i32, i32
  }
  func.func @transform_8(%arg0: i32) -> (i32, i32) {
    %c0_i32 = arith.constant 0 : i32
    %c0_i32_0 = arith.constant 0 : i32
    %c0_i32_1 = arith.constant 0 : i32
    return %c0_i32, %c0_i32_0 : i32, i32
  }
  func.func @transform_9(%arg0: i32) -> (i32, i32) {
    %c0_i32 = arith.constant 0 : i32
    %c0_i32_0 = arith.constant 0 : i32
    %c0_i32_1 = arith.constant 0 : i32
    return %c0_i32, %c0_i32_0 : i32, i32
  }
  func.func @transform_10(%arg0: i32) -> (i32, i32) {
    %c0_i32 = arith.constant 0 : i32
    %c0_i32_0 = arith.constant 0 : i32
    %c0_i32_1 = arith.constant 0 : i32
    return %c0_i32, %c0_i32_0 : i32, i32
  }
  func.func @transform_11(%arg0: i32) -> (i32, i32) {
    %c0_i32 = arith.constant 0 : i32
    %c0_i32_0 = arith.constant 0 : i32
    %c0_i32_1 = arith.constant 0 : i32
    return %c0_i32, %c0_i32_0 : i32, i32
  }
  func.func @transform_12(%arg0: i32) -> (i32, i32) {
    %c0_i32 = arith.constant 0 : i32
    %c0_i32_0 = arith.constant 0 : i32
    %c0_i32_1 = arith.constant 0 : i32
    return %c0_i32, %c0_i32_0 : i32, i32
  }
  func.func @transform_13(%arg0: i32) -> (i32, i32) {
    %c0_i32 = arith.constant 0 : i32
    %c0_i32_0 = arith.constant 0 : i32
    %c0_i32_1 = arith.constant 0 : i32
    return %c0_i32, %c0_i32_0 : i32, i32
  }
  func.func @transform_14(%arg0: i32) -> (i32, i32) {
    %c0_i32 = arith.constant 0 : i32
    %c0_i32_0 = arith.constant 0 : i32
    %c0_i32_1 = arith.constant 0 : i32
    return %c0_i32, %c0_i32_0 : i32, i32
  }
  func.func @transform_15(%arg0: i32) -> (i32, i32) {
    %c0_i32 = arith.constant 0 : i32
    %c0_i32_0 = arith.constant 0 : i32
    %c0_i32_1 = arith.constant 0 : i32
    return %c0_i32, %c0_i32_0 : i32, i32
  }
  func.func @transform_16(%arg0: i32) -> (i32, i32) {
    %c0_i32 = arith.constant 0 : i32
    %c0_i32_0 = arith.constant 0 : i32
    %c0_i32_1 = arith.constant 0 : i32
    return %c0_i32, %c0_i32_0 : i32, i32
  }
  func.func @transform_17(%arg0: i32) -> (i32, i32) {
    %c0_i32 = arith.constant 0 : i32
    %c0_i32_0 = arith.constant 0 : i32
    %c0_i32_1 = arith.constant 0 : i32
    return %c0_i32, %c0_i32_0 : i32, i32
  }
  func.func @transform_18(%arg0: i32) -> (i32, i32) {
    %c0_i32 = arith.constant 0 : i32
    %c0_i32_0 = arith.constant 0 : i32
    %c0_i32_1 = arith.constant 0 : i32
    return %c0_i32, %c0_i32_0 : i32, i32
  }
  func.func @transform_19(%arg0: i32) -> (i32, i32) {
    %c0_i32 = arith.constant 0 : i32
    %c0_i32_0 = arith.constant 0 : i32
    return %arg0, %c0_i32 : i32, i32
  }
}

</mosaic_0001>

<llo_original>
// kernel: _ae1_forward_impl.1
$region0: #{_ae1_forward_impl.1}
  #allocation0 [shape = 'u32[]', space=smem, size = 0x4, offset = 0x4, fixed_abs, tag = 'smem constant byte address 0x4 - core index']
  #allocation1 [shape = 'u32[144,128]{1,0:T(1,128)}', space=vmem, size = 0x12000, scoped, tag = 'internal scratch']
  %s0 = inlined_call_operand.vmem [shape: f32[16,200], index: 0, kind: input, shape index: {}]
  %s1 = inlined_call_operand.vmem [shape: f32[200,64], index: 1, kind: input, shape index: {}]
  %s2 = inlined_call_operand.vmem [shape: f32[64,32], index: 2, kind: input, shape index: {}]
  %s3 = inlined_call_operand.vmem [shape: f32[32,16], index: 3, kind: input, shape index: {}]
  %s4 = inlined_call_operand.vmem [shape: f32[16,8], index: 4, kind: input, shape index: {}]
  %s5 = inlined_call_operand.vmem [shape: f32[8,8], index: 5, kind: input, shape index: {}]
  %s6 = inlined_call_operand.vmem [shape: f32[8,16], index: 6, kind: input, shape index: {}]
  %s7 = inlined_call_operand.vmem [shape: f32[16,32], index: 7, kind: input, shape index: {}]
  %s8 = inlined_call_operand.vmem [shape: f32[32,64], index: 8, kind: input, shape index: {}]
  %s9 = inlined_call_operand.vmem [shape: f32[64,200], index: 9, kind: input, shape index: {}]
  %s10 = inlined_call_operand.vmem [shape: f32[1,64], index: 10, kind: input, shape index: {}]
  %s11 = inlined_call_operand.vmem [shape: f32[1,32], index: 11, kind: input, shape index: {}]
  %s12 = inlined_call_operand.vmem [shape: f32[1,16], index: 12, kind: input, shape index: {}]
  %s13 = inlined_call_operand.vmem [shape: f32[1,8], index: 13, kind: input, shape index: {}]
  %s14 = inlined_call_operand.vmem [shape: f32[1,8], index: 14, kind: input, shape index: {}]
  %s15 = inlined_call_operand.vmem [shape: f32[1,16], index: 15, kind: input, shape index: {}]
  %s16 = inlined_call_operand.vmem [shape: f32[1,32], index: 16, kind: input, shape index: {}]
  %s17 = inlined_call_operand.vmem [shape: f32[1,64], index: 17, kind: input, shape index: {}]
  %s18 = inlined_call_operand.vmem [shape: f32[1,200], index: 18, kind: input, shape index: {}]
  %s19 = inlined_call_operand.hbm [shape: f32[16,200], index: 19, kind: output, shape index: {}]
  %s20 = sld [smem:[#allocation0]]
  $region109: #{_ae1_forward_impl.1} parent=0
    _
  %s22 = ssub.s32 1, %s20
  %s23 = scalar_select 0, %s22, %s20
  $region1: #{_ae1_forward_impl.1} parent=0
    #allocation2 [shape = 'u8[16384]{0}', space=vmem, size = 0x4000, scoped, tag = 'output window, operand 0']
    #allocation3 [shape = 's32[2]{0}', space=sflag, size = 0x8, scoped, tag = 'scoped memory for _ae1_forward_impl.1']
    %24 = vsyncpa [#allocation3], 0
    %s25 = scalar_lea.sflag [#allocation3], 1
    %26 = vsyncpa %s25, 0
    loop: start=0, step=1, limit=4
    $region2: #{_ae1_forward_impl.1} parent=1 // loop_pre_header
      _
    $region3: #{_ae1_forward_impl.1} parent=1 // loop_header
      %s28 = sphi 0, %s32
      %p29 = scmp.ge.s32.totalorder %s28, 4
      %s38 = sphi 0, %s40
      %s41 = sphi 0, %s38
      %s42 = sphi 0, %s41
      %s58 = sphi 0, %s42
      %s62 = sphi 0, %s62
      %s64 = sphi 0, %s62
      %s65 = sphi 0, %s64
      %s79 = sphi 0, %s65
      %s83 = sphi 0, %s83
      %s85 = sphi 0, %s83
      %s86 = sphi 0, %s85
      %s100 = sphi 0, %s86
      %s104 = sphi 0, %s104
      %s106 = sphi 0, %s104
      %s107 = sphi 0, %s106
      %s121 = sphi 0, %s107
      %s125 = sphi 0, %s125
      %s127 = sphi 0, %s125
      %s128 = sphi 0, %s127
      %s142 = sphi 0, %s128
      %s146 = sphi 0, %s146
      %s148 = sphi 0, %s146
      %s149 = sphi 0, %s148
      %s163 = sphi 0, %s149
      %s167 = sphi 0, %s167
      %s169 = sphi 0, %s167
      %s170 = sphi 0, %s169
      %s184 = sphi 0, %s170
      %s188 = sphi 0, %s188
      %s190 = sphi 0, %s188
      %s191 = sphi 0, %s190
      %s205 = sphi 0, %s191
      %s209 = sphi 0, %s209
      %s211 = sphi 0, %s209
      %s212 = sphi 0, %s211
      %s226 = sphi 0, %s212
      %s230 = sphi 0, %s230
      %s232 = sphi 0, %s230
      %s233 = sphi 0, %s232
      %s247 = sphi 0, %s233
      %s251 = sphi 0, %s251
      %s253 = sphi 0, %s251
      %s254 = sphi 0, %s253
      %s268 = sphi 0, %s254
      %s272 = sphi 0, %s272
      %s274 = sphi 0, %s272
      %s275 = sphi 0, %s274
      %s289 = sphi 0, %s275
      %s293 = sphi 0, %s293
      %s295 = sphi 0, %s293
      %s296 = sphi 0, %s295
      %s310 = sphi 0, %s296
      %s314 = sphi 0, %s314
      %s316 = sphi 0, %s314
      %s317 = sphi 0, %s316
      %s331 = sphi 0, %s317
      %s335 = sphi 0, %s335
      %s337 = sphi 0, %s335
      %s338 = sphi 0, %s337
      %s352 = sphi 0, %s338
      %s356 = sphi 0, %s356
      %s358 = sphi 0, %s356
      %s359 = sphi 0, %s358
      %s373 = sphi 0, %s359
      %s377 = sphi 0, %s377
      %s379 = sphi 0, %s377
      %s380 = sphi 0, %s379
      %s394 = sphi 0, %s380
      %s398 = sphi 0, %s398
      %s400 = sphi 0, %s398
      %s401 = sphi 0, %s400
      %s415 = sphi 0, %s401
      %s419 = sphi 0, %s419
      %s421 = sphi 0, %s419
      %s422 = sphi 0, %s421
      %s436 = sphi 0, %s422
      %s442 = sphi 0, %s444
      %s445 = sphi 0, %s442
      %s446 = sphi 0, %s445
      %s462 = sphi 0, %s446
    $region4: #{_ae1_forward_impl.1} parent=1 // loop_header_branch
      %31 = sbr.rel (%p29) target = $region8
    $region5: #{_ae1_forward_impl.1} parent=1 // loop_body
      %s33 = ssub.s32 %s28, 1
      %s34 = ssub.s32 %s28, 2
      %s35 = sadd.s32 %s28, 1
      %s36 = ssub.s32 %s28, %s35
      %p37 = scmp.eq.s32.totalorder %s36, 0
      %s39 = sadd.s32 %s38, 1
      %s40 = scalar_select %p37, %s38, %s39
      %p43 = pneg %p37
      %p44 = scmp.eq.s32.totalorder %s28, 1
      %p45 = por %p43, %p44
      %p46 = scmp.ne.s32.totalorder %s38, %s41
      %p47 = scmp.eq.s32.totalorder %s28, 0
      %p48 = por %p46, %p47
      %p49 = scmp.ne.s32.totalorder %s38, %s41
      %p50 = scmp.eq.s32.totalorder %s33, 1
      %p51 = por %p49, %p50
      %p52 = scmp.ne.s32.totalorder %s41, %s42
      %p53 = scmp.eq.s32.totalorder %s33, 0
      %p54 = por %p52, %p53
      %p55 = scmp.ne.s32.totalorder %s41, %s42
      %p56 = scmp.eq.s32.totalorder %s34, 1
      %p57 = por %p55, %p56
      %p59 = scmp.ne.s32.totalorder %s42, %s58
      %p60 = scmp.eq.s32.totalorder %s34, 0
      %p61 = por %p59, %p60
      %s63 = sadd.s32 %s62, 1
      %p66 = scmp.eq.s32.totalorder %s28, 1
      %p67 = scmp.ne.s32.totalorder %s62, %s64
      %p68 = scmp.eq.s32.totalorder %s28, 0
      %p69 = por %p67, %p68
      %p70 = scmp.ne.s32.totalorder %s62, %s64
      %p71 = scmp.eq.s32.totalorder %s33, 1
      %p72 = por %p70, %p71
      %p73 = scmp.ne.s32.totalorder %s64, %s65
      %p74 = scmp.eq.s32.totalorder %s33, 0
      %p75 = por %p73, %p74
      %p76 = scmp.ne.s32.totalorder %s64, %s65
      %p77 = scmp.eq.s32.totalorder %s34, 1
      %p78 = por %p76, %p77
      %p80 = scmp.ne.s32.totalorder %s65, %s79
      %p81 = scmp.eq.s32.totalorder %s34, 0
      %p82 = por %p80, %p81
      %s84 = sadd.s32 %s83, 1
      %p87 = scmp.eq.s32.totalorder %s28, 1
      %p88 = scmp.ne.s32.totalorder %s83, %s85
      %p89 = scmp.eq.s32.totalorder %s28, 0
      %p90 = por %p88, %p89
      %p91 = scmp.ne.s32.totalorder %s83, %s85
      %p92 = scmp.eq.s32.totalorder %s33, 1
      %p93 = por %p91, %p92
      %p94 = scmp.ne.s32.totalorder %s85, %s86
      %p95 = scmp.eq.s32.totalorder %s33, 0
      %p96 = por %p94, %p95
      %p97 = scmp.ne.s32.totalorder %s85, %s86
      %p98 = scmp.eq.s32.totalorder %s34, 1
      %p99 = por %p97, %p98
      %p101 = scmp.ne.s32.totalorder %s86, %s100
      %p102 = scmp.eq.s32.totalorder %s34, 0
      %p103 = por %p101, %p102
      %s105 = sadd.s32 %s104, 1
      %p108 = scmp.eq.s32.totalorder %s28, 1
      %p109 = scmp.ne.s32.totalorder %s104, %s106
      %p110 = scmp.eq.s32.totalorder %s28, 0
      %p111 = por %p109, %p110
      %p112 = scmp.ne.s32.totalorder %s104, %s106
      %p113 = scmp.eq.s32.totalorder %s33, 1
      %p114 = por %p112, %p113
      %p115 = scmp.ne.s32.totalorder %s106, %s107
      %p116 = scmp.eq.s32.totalorder %s33, 0
      %p117 = por %p115, %p116
      %p118 = scmp.ne.s32.totalorder %s106, %s107
      %p119 = scmp.eq.s32.totalorder %s34, 1
      %p120 = por %p118, %p119
      %p122 = scmp.ne.s32.totalorder %s107, %s121
      %p123 = scmp.eq.s32.totalorder %s34, 0
      %p124 = por %p122, %p123
      %s126 = sadd.s32 %s125, 1
      %p129 = scmp.eq.s32.totalorder %s28, 1
      %p130 = scmp.ne.s32.totalorder %s125, %s127
      %p131 = scmp.eq.s32.totalorder %s28, 0
      %p132 = por %p130, %p131
      %p133 = scmp.ne.s32.totalorder %s125, %s127
      %p134 = scmp.eq.s32.totalorder %s33, 1
      %p135 = por %p133, %p134
      %p136 = scmp.ne.s32.totalorder %s127, %s128
      %p137 = scmp.eq.s32.totalorder %s33, 0
      %p138 = por %p136, %p137
      %p139 = scmp.ne.s32.totalorder %s127, %s128
      %p140 = scmp.eq.s32.totalorder %s34, 1
      %p141 = por %p139, %p140
      %p143 = scmp.ne.s32.totalorder %s128, %s142
      %p144 = scmp.eq.s32.totalorder %s34, 0
      %p145 = por %p143, %p144
      %s147 = sadd.s32 %s146, 1
      %p150 = scmp.eq.s32.totalorder %s28, 1
      %p151 = scmp.ne.s32.totalorder %s146, %s148
      %p152 = scmp.eq.s32.totalorder %s28, 0
      %p153 = por %p151, %p152
      %p154 = scmp.ne.s32.totalorder %s146, %s148
      %p155 = scmp.eq.s32.totalorder %s33, 1
      %p156 = por %p154, %p155
      %p157 = scmp.ne.s32.totalorder %s148, %s149
      %p158 = scmp.eq.s32.totalorder %s33, 0
      %p159 = por %p157, %p158
      %p160 = scmp.ne.s32.totalorder %s148, %s149
      %p161 = scmp.eq.s32.totalorder %s34, 1
      %p162 = por %p160, %p161
      %p164 = scmp.ne.s32.totalorder %s149, %s163
      %p165 = scmp.eq.s32.totalorder %s34, 0
      %p166 = por %p164, %p165
      %s168 = sadd.s32 %s167, 1
      %p171 = scmp.eq.s32.totalorder %s28, 1
      %p172 = scmp.ne.s32.totalorder %s167, %s169
      %p173 = scmp.eq.s32.totalorder %s28, 0
      %p174 = por %p172, %p173
      %p175 = scmp.ne.s32.totalorder %s167, %s169
      %p176 = scmp.eq.s32.totalorder %s33, 1
      %p177 = por %p175, %p176
      %p178 = scmp.ne.s32.totalorder %s169, %s170
      %p179 = scmp.eq.s32.totalorder %s33, 0
      %p180 = por %p178, %p179
      %p181 = scmp.ne.s32.totalorder %s169, %s170
      %p182 = scmp.eq.s32.totalorder %s34, 1
      %p183 = por %p181, %p182
      %p185 = scmp.ne.s32.totalorder %s170, %s184
      %p186 = scmp.eq.s32.totalorder %s34, 0
      %p187 = por %p185, %p186
      %s189 = sadd.s32 %s188, 1
      %p192 = scmp.eq.s32.totalorder %s28, 1
      %p193 = scmp.ne.s32.totalorder %s188, %s190
      %p194 = scmp.eq.s32.totalorder %s28, 0
      %p195 = por %p193, %p194
      %p196 = scmp.ne.s32.totalorder %s188, %s190
      %p197 = scmp.eq.s32.totalorder %s33, 1
      %p198 = por %p196, %p197
      %p199 = scmp.ne.s32.totalorder %s190, %s191
      %p200 = scmp.eq.s32.totalorder %s33, 0
      %p201 = por %p199, %p200
      %p202 = scmp.ne.s32.totalorder %s190, %s191
      %p203 = scmp.eq.s32.totalorder %s34, 1
      %p204 = por %p202, %p203
      %p206 = scmp.ne.s32.totalorder %s191, %s205
      %p207 = scmp.eq.s32.totalorder %s34, 0
      %p208 = por %p206, %p207
      %s210 = sadd.s32 %s209, 1
      %p213 = scmp.eq.s32.totalorder %s28, 1
      %p214 = scmp.ne.s32.totalorder %s209, %s211
      %p215 = scmp.eq.s32.totalorder %s28, 0
      %p216 = por %p214, %p215
      %p217 = scmp.ne.s32.totalorder %s209, %s211
      %p218 = scmp.eq.s32.totalorder %s33, 1
      %p219 = por %p217, %p218
      %p220 = scmp.ne.s32.totalorder %s211, %s212
      %p221 = scmp.eq.s32.totalorder %s33, 0
      %p222 = por %p220, %p221
      %p223 = scmp.ne.s32.totalorder %s211, %s212
      %p224 = scmp.eq.s32.totalorder %s34, 1
      %p225 = por %p223, %p224
      %p227 = scmp.ne.s32.totalorder %s212, %s226
      %p228 = scmp.eq.s32.totalorder %s34, 0
      %p229 = por %p227, %p228
      %s231 = sadd.s32 %s230, 1
      %p234 = scmp.eq.s32.totalorder %s28, 1
      %p235 = scmp.ne.s32.totalorder %s230, %s232
      %p236 = scmp.eq.s32.totalorder %s28, 0
      %p237 = por %p235, %p236
      %p238 = scmp.ne.s32.totalorder %s230, %s232
      %p239 = scmp.eq.s32.totalorder %s33, 1
      %p240 = por %p238, %p239
      %p241 = scmp.ne.s32.totalorder %s232, %s233
      %p242 = scmp.eq.s32.totalorder %s33, 0
      %p243 = por %p241, %p242
      %p244 = scmp.ne.s32.totalorder %s232, %s233
      %p245 = scmp.eq.s32.totalorder %s34, 1
      %p246 = por %p244, %p245
      %p248 = scmp.ne.s32.totalorder %s233, %s247
      %p249 = scmp.eq.s32.totalorder %s34, 0
      %p250 = por %p248, %p249
      %s252 = sadd.s32 %s251, 1
      %p255 = scmp.eq.s32.totalorder %s28, 1
      %p256 = scmp.ne.s32.totalorder %s251, %s253
      %p257 = scmp.eq.s32.totalorder %s28, 0
      %p258 = por %p256, %p257
      %p259 = scmp.ne.s32.totalorder %s251, %s253
      %p260 = scmp.eq.s32.totalorder %s33, 1
      %p261 = por %p259, %p260
      %p262 = scmp.ne.s32.totalorder %s253, %s254
      %p263 = scmp.eq.s32.totalorder %s33, 0
      %p264 = por %p262, %p263
      %p265 = scmp.ne.s32.totalorder %s253, %s254
      %p266 = scmp.eq.s32.totalorder %s34, 1
      %p267 = por %p265, %p266
      %p269 = scmp.ne.s32.totalorder %s254, %s268
      %p270 = scmp.eq.s32.totalorder %s34, 0
      %p271 = por %p269, %p270
      %s273 = sadd.s32 %s272, 1
      %p276 = scmp.eq.s32.totalorder %s28, 1
      %p277 = scmp.ne.s32.totalorder %s272, %s274
      %p278 = scmp.eq.s32.totalorder %s28, 0
      %p279 = por %p277, %p278
      %p280 = scmp.ne.s32.totalorder %s272, %s274
      %p281 = scmp.eq.s32.totalorder %s33, 1
      %p282 = por %p280, %p281
      %p283 = scmp.ne.s32.totalorder %s274, %s275
      %p284 = scmp.eq.s32.totalorder %s33, 0
      %p285 = por %p283, %p284
      %p286 = scmp.ne.s32.totalorder %s274, %s275
      %p287 = scmp.eq.s32.totalorder %s34, 1
      %p288 = por %p286, %p287
      %p290 = scmp.ne.s32.totalorder %s275, %s289
      %p291 = scmp.eq.s32.totalorder %s34, 0
      %p292 = por %p290, %p291
      %s294 = sadd.s32 %s293, 1
      %p297 = scmp.eq.s32.totalorder %s28, 1
      %p298 = scmp.ne.s32.totalorder %s293, %s295
      %p299 = scmp.eq.s32.totalorder %s28, 0
      %p300 = por %p298, %p299
      %p301 = scmp.ne.s32.totalorder %s293, %s295
      %p302 = scmp.eq.s32.totalorder %s33, 1
      %p303 = por %p301, %p302
      %p304 = scmp.ne.s32.totalorder %s295, %s296
      %p305 = scmp.eq.s32.totalorder %s33, 0
      %p306 = por %p304, %p305
      %p307 = scmp.ne.s32.totalorder %s295, %s296
      %p308 = scmp.eq.s32.totalorder %s34, 1
      %p309 = por %p307, %p308
      %p311 = scmp.ne.s32.totalorder %s296, %s310
      %p312 = scmp.eq.s32.totalorder %s34, 0
      %p313 = por %p311, %p312
      %s315 = sadd.s32 %s314, 1
      %p318 = scmp.eq.s32.totalorder %s28, 1
      %p319 = scmp.ne.s32.totalorder %s314, %s316
      %p320 = scmp.eq.s32.totalorder %s28, 0
      %p321 = por %p319, %p320
      %p322 = scmp.ne.s32.totalorder %s314, %s316
      %p323 = scmp.eq.s32.totalorder %s33, 1
      %p324 = por %p322, %p323
      %p325 = scmp.ne.s32.totalorder %s316, %s317
      %p326 = scmp.eq.s32.totalorder %s33, 0
      %p327 = por %p325, %p326
      %p328 = scmp.ne.s32.totalorder %s316, %s317
      %p329 = scmp.eq.s32.totalorder %s34, 1
      %p330 = por %p328, %p329
      %p332 = scmp.ne.s32.totalorder %s317, %s331
      %p333 = scmp.eq.s32.totalorder %s34, 0
      %p334 = por %p332, %p333
      %s336 = sadd.s32 %s335, 1
      %p339 = scmp.eq.s32.totalorder %s28, 1
      %p340 = scmp.ne.s32.totalorder %s335, %s337
      %p341 = scmp.eq.s32.totalorder %s28, 0
      %p342 = por %p340, %p341
      %p343 = scmp.ne.s32.totalorder %s335, %s337
      %p344 = scmp.eq.s32.totalorder %s33, 1
      %p345 = por %p343, %p344
      %p346 = scmp.ne.s32.totalorder %s337, %s338
      %p347 = scmp.eq.s32.totalorder %s33, 0
      %p348 = por %p346, %p347
      %p349 = scmp.ne.s32.totalorder %s337, %s338
      %p350 = scmp.eq.s32.totalorder %s34, 1
      %p351 = por %p349, %p350
      %p353 = scmp.ne.s32.totalorder %s338, %s352
      %p354 = scmp.eq.s32.totalorder %s34, 0
      %p355 = por %p353, %p354
      %s357 = sadd.s32 %s356, 1
      %p360 = scmp.eq.s32.totalorder %s28, 1
      %p361 = scmp.ne.s32.totalorder %s356, %s358
      %p362 = scmp.eq.s32.totalorder %s28, 0
      %p363 = por %p361, %p362
      %p364 = scmp.ne.s32.totalorder %s356, %s358
      %p365 = scmp.eq.s32.totalorder %s33, 1
      %p366 = por %p364, %p365
      %p367 = scmp.ne.s32.totalorder %s358, %s359
      %p368 = scmp.eq.s32.totalorder %s33, 0
      %p369 = por %p367, %p368
      %p370 = scmp.ne.s32.totalorder %s358, %s359
      %p371 = scmp.eq.s32.totalorder %s34, 1
      %p372 = por %p370, %p371
      %p374 = scmp.ne.s32.totalorder %s359, %s373
      %p375 = scmp.eq.s32.totalorder %s34, 0
      %p376 = por %p374, %p375
      %s378 = sadd.s32 %s377, 1
      %p381 = scmp.eq.s32.totalorder %s28, 1
      %p382 = scmp.ne.s32.totalorder %s377, %s379
      %p383 = scmp.eq.s32.totalorder %s28, 0
      %p384 = por %p382, %p383
      %p385 = scmp.ne.s32.totalorder %s377, %s379
      %p386 = scmp.eq.s32.totalorder %s33, 1
      %p387 = por %p385, %p386
      %p388 = scmp.ne.s32.totalorder %s379, %s380
      %p389 = scmp.eq.s32.totalorder %s33, 0
      %p390 = por %p388, %p389
      %p391 = scmp.ne.s32.totalorder %s379, %s380
      %p392 = scmp.eq.s32.totalorder %s34, 1
      %p393 = por %p391, %p392
      %p395 = scmp.ne.s32.totalorder %s380, %s394
      %p396 = scmp.eq.s32.totalorder %s34, 0
      %p397 = por %p395, %p396
      %s399 = sadd.s32 %s398, 1
      %p402 = scmp.eq.s32.totalorder %s28, 1
      %p403 = scmp.ne.s32.totalorder %s398, %s400
      %p404 = scmp.eq.s32.totalorder %s28, 0
      %p405 = por %p403, %p404
      %p406 = scmp.ne.s32.totalorder %s398, %s400
      %p407 = scmp.eq.s32.totalorder %s33, 1
      %p408 = por %p406, %p407
      %p409 = scmp.ne.s32.totalorder %s400, %s401
      %p410 = scmp.eq.s32.totalorder %s33, 0
      %p411 = por %p409, %p410
      %p412 = scmp.ne.s32.totalorder %s400, %s401
      %p413 = scmp.eq.s32.totalorder %s34, 1
      %p414 = por %p412, %p413
      %p416 = scmp.ne.s32.totalorder %s401, %s415
      %p417 = scmp.eq.s32.totalorder %s34, 0
      %p418 = por %p416, %p417
      %s420 = sadd.s32 %s419, 1
      %p423 = scmp.eq.s32.totalorder %s28, 1
      %p424 = scmp.ne.s32.totalorder %s419, %s421
      %p425 = scmp.eq.s32.totalorder %s28, 0
      %p426 = por %p424, %p425
      %p427 = scmp.ne.s32.totalorder %s419, %s421
      %p428 = scmp.eq.s32.totalorder %s33, 1
      %p429 = por %p427, %p428
      %p430 = scmp.ne.s32.totalorder %s421, %s422
      %p431 = scmp.eq.s32.totalorder %s33, 0
      %p432 = por %p430, %p431
      %p433 = scmp.ne.s32.totalorder %s421, %s422
      %p434 = scmp.eq.s32.totalorder %s34, 1
      %p435 = por %p433, %p434
      %p437 = scmp.ne.s32.totalorder %s422, %s436
      %p438 = scmp.eq.s32.totalorder %s34, 0
      %p439 = por %p437, %p438
      %s440 = ssub.s32 %s28, %s35
      %p441 = scmp.eq.s32.totalorder %s440, 0
      %s443 = sadd.s32 %s442, 1
      %s444 = scalar_select %p441, %s442, %s443
      %p447 = pneg %p441
      %p448 = scmp.eq.s32.totalorder %s28, 1
      %p449 = por %p447, %p448
      %p450 = scmp.ne.s32.totalorder %s442, %s445
      %p451 = scmp.eq.s32.totalorder %s28, 0
      %p452 = por %p450, %p451
      %p453 = scmp.ne.s32.totalorder %s442, %s445
      %p454 = scmp.eq.s32.totalorder %s33, 1
      %p455 = por %p453, %p454
      %p456 = scmp.ne.s32.totalorder %s445, %s446
      %p457 = scmp.eq.s32.totalorder %s33, 0
      %p458 = por %p456, %p457
      %p459 = scmp.ne.s32.totalorder %s445, %s446
      %p460 = scmp.eq.s32.totalorder %s34, 1
      %p461 = por %p459, %p460
      %p463 = scmp.ne.s32.totalorder %s446, %s462
      %p464 = scmp.eq.s32.totalorder %s34, 0
      %p465 = por %p463, %p464
      %p466 = scmp.le.s32.totalorder 1, %s28
      %p467 = scmp.lt.s32.totalorder %s28, 3
      %p468 = pnand %p466, %p467
      %p469 = pneg %p468
      // Predicated region
      $region9: #{_ae1_forward_impl.1} parent=5 // pred_check
        _
      $region10: #{_ae1_forward_impl.1} parent=5 // pred_check_branch
        %471 = sbr.rel (%p468) target = $region12
      $region11: #{_ae1_forward_impl.1} parent=5 // pred_region
        %s472 = ssub.s32 %s28, 1
        // Predicated region
        $region13: #{_ae1_forward_impl.1} parent=11 // pred_check
          %p473 = pneg %p75
        $region14: #{_ae1_forward_impl.1} parent=11 // pred_check_branch
          %475 = sbr.rel (%p473) target = $region16
        $region15: #{_ae1_forward_impl.1} parent=11 // pred_region
          _
        $region16: #{_ae1_forward_impl.1} parent=11 // pred_fallthru
          _
        // Predicated region
        $region17: #{_ae1_forward_impl.1} parent=11 // pred_check
          %p476 = pneg %p96
        $region18: #{_ae1_forward_impl.1} parent=11 // pred_check_branch
          %478 = sbr.rel (%p476) target = $region20
        $region19: #{_ae1_forward_impl.1} parent=11 // pred_region
          _
        $region20: #{_ae1_forward_impl.1} parent=11 // pred_fallthru
          _
        // Predicated region
        $region21: #{_ae1_forward_impl.1} parent=11 // pred_check
          %p479 = pneg %p117
        $region22: #{_ae1_forward_impl.1} parent=11 // pred_check_branch
          %481 = sbr.rel (%p479) target = $region24
        $region23: #{_ae1_forward_impl.1} parent=11 // pred_region
          _
        $region24: #{_ae1_forward_impl.1} parent=11 // pred_fallthru
          _
        // Predicated region
        $region25: #{_ae1_forward_impl.1} parent=11 // pred_check
          %p482 = pneg %p138
        $region26: #{_ae1_forward_impl.1} parent=11 // pred_check_branch
          %484 = sbr.rel (%p482) target = $region28
        $region27: #{_ae1_forward_impl.1} parent=11 // pred_region
          _
        $region28: #{_ae1_forward_impl.1} parent=11 // pred_fallthru
          _
        // Predicated region
        $region29: #{_ae1_forward_impl.1} parent=11 // pred_check
          %p485 = pneg %p159
        $region30: #{_ae1_forward_impl.1} parent=11 // pred_check_branch
          %487 = sbr.rel (%p485) target = $region32
        $region31: #{_ae1_forward_impl.1} parent=11 // pred_region
          _
        $region32: #{_ae1_forward_impl.1} parent=11 // pred_fallthru
          _
        // Predicated region
        $region33: #{_ae1_forward_impl.1} parent=11 // pred_check
          %p488 = pneg %p180
        $region34: #{_ae1_forward_impl.1} parent=11 // pred_check_branch
          %490 = sbr.rel (%p488) target = $region36
        $region35: #{_ae1_forward_impl.1} parent=11 // pred_region
          _
        $region36: #{_ae1_forward_impl.1} parent=11 // pred_fallthru
          _
        // Predicated region
        $region37: #{_ae1_forward_impl.1} parent=11 // pred_check
          %p491 = pneg %p201
        $region38: #{_ae1_forward_impl.1} parent=11 // pred_check_branch
          %493 = sbr.rel (%p491) target = $region40
        $region39: #{_ae1_forward_impl.1} parent=11 // pred_region
          _
        $region40: #{_ae1_forward_impl.1} parent=11 // pred_fallthru
          _
        // Predicated region
        $region41: #{_ae1_forward_impl.1} parent=11 // pred_check
          %p494 = pneg %p222
        $region42: #{_ae1_forward_impl.1} parent=11 // pred_check_branch
          %496 = sbr.rel (%p494) target = $region44
        $region43: #{_ae1_forward_impl.1} parent=11 // pred_region
          _
        $region44: #{_ae1_forward_impl.1} parent=11 // pred_fallthru
          _
        // Predicated region
        $region45: #{_ae1_forward_impl.1} parent=11 // pred_check
          %p497 = pneg %p243
        $region46: #{_ae1_forward_impl.1} parent=11 // pred_check_branch
          %499 = sbr.rel (%p497) target = $region48
        $region47: #{_ae1_forward_impl.1} parent=11 // pred_region
          _
        $region48: #{_ae1_forward_impl.1} parent=11 // pred_fallthru
          _
        // Predicated region
        $region49: #{_ae1_forward_impl.1} parent=11 // pred_check
          %p500 = pneg %p264
        $region50: #{_ae1_forward_impl.1} parent=11 // pred_check_branch
          %502 = sbr.rel (%p500) target = $region52
        $region51: #{_ae1_forward_impl.1} parent=11 // pred_region
          _
        $region52: #{_ae1_forward_impl.1} parent=11 // pred_fallthru
          _
        // Predicated region
        $region53: #{_ae1_forward_impl.1} parent=11 // pred_check
          %p503 = pneg %p285
        $region54: #{_ae1_forward_impl.1} parent=11 // pred_check_branch
          %505 = sbr.rel (%p503) target = $region56
        $region55: #{_ae1_forward_impl.1} parent=11 // pred_region
          _
        $region56: #{_ae1_forward_impl.1} parent=11 // pred_fallthru
          _
        // Predicated region
        $region57: #{_ae1_forward_impl.1} parent=11 // pred_check
          %p506 = pneg %p306
        $region58: #{_ae1_forward_impl.1} parent=11 // pred_check_branch
          %508 = sbr.rel (%p506) target = $region60
        $region59: #{_ae1_forward_impl.1} parent=11 // pred_region
          _
        $region60: #{_ae1_forward_impl.1} parent=11 // pred_fallthru
          _
        // Predicated region
        $region61: #{_ae1_forward_impl.1} parent=11 // pred_check
          %p509 = pneg %p327
        $region62: #{_ae1_forward_impl.1} parent=11 // pred_check_branch
          %511 = sbr.rel (%p509) target = $region64
        $region63: #{_ae1_forward_impl.1} parent=11 // pred_region
          _
        $region64: #{_ae1_forward_impl.1} parent=11 // pred_fallthru
          _
        // Predicated region
        $region65: #{_ae1_forward_impl.1} parent=11 // pred_check
          %p512 = pneg %p348
        $region66: #{_ae1_forward_impl.1} parent=11 // pred_check_branch
          %514 = sbr.rel (%p512) target = $region68
        $region67: #{_ae1_forward_impl.1} parent=11 // pred_region
          _
        $region68: #{_ae1_forward_impl.1} parent=11 // pred_fallthru
          _
        // Predicated region
        $region69: #{_ae1_forward_impl.1} parent=11 // pred_check
          %p515 = pneg %p369
        $region70: #{_ae1_forward_impl.1} parent=11 // pred_check_branch
          %517 = sbr.rel (%p515) target = $region72
        $region71: #{_ae1_forward_impl.1} parent=11 // pred_region
          _
        $region72: #{_ae1_forward_impl.1} parent=11 // pred_fallthru
          _
        // Predicated region
        $region73: #{_ae1_forward_impl.1} parent=11 // pred_check
          %p518 = pneg %p390
        $region74: #{_ae1_forward_impl.1} parent=11 // pred_check_branch
          %520 = sbr.rel (%p518) target = $region76
        $region75: #{_ae1_forward_impl.1} parent=11 // pred_region
          _
        $region76: #{_ae1_forward_impl.1} parent=11 // pred_fallthru
          _
        // Predicated region
        $region77: #{_ae1_forward_impl.1} parent=11 // pred_check
          %p521 = pneg %p411
        $region78: #{_ae1_forward_impl.1} parent=11 // pred_check_branch
          %523 = sbr.rel (%p521) target = $region80
        $region79: #{_ae1_forward_impl.1} parent=11 // pred_region
          _
        $region80: #{_ae1_forward_impl.1} parent=11 // pred_fallthru
          _
        // Predicated region
        $region81: #{_ae1_forward_impl.1} parent=11 // pred_check
          %p524 = pneg %p432
        $region82: #{_ae1_forward_impl.1} parent=11 // pred_check_branch
          %526 = sbr.rel (%p524) target = $region84
        $region83: #{_ae1_forward_impl.1} parent=11 // pred_region
          _
        $region84: #{_ae1_forward_impl.1} parent=11 // pred_fallthru
          _
      $region12: #{_ae1_forward_impl.1} parent=5 // pred_fallthru
        _
      %p527 = scmp.lt.s32.totalorder %s28, 2
      // Predicated region
      $region85: #{_ae1_forward_impl.1} parent=5 // pred_check
        %p528 = pneg %p527
      $region86: #{_ae1_forward_impl.1} parent=5 // pred_check_branch
        %530 = sbr.rel (%p528) target = $region88
      $region87: #{_ae1_forward_impl.1} parent=5 // pred_region
        // Predicated region
        $region89: #{_ae1_forward_impl.1} parent=87 // pred_check
          %p531 = pneg %p48
        $region90: #{_ae1_forward_impl.1} parent=87 // pred_check_branch
          %533 = sbr.rel (%p531) target = $region92
        $region91: #{_ae1_forward_impl.1} parent=87 // pred_region
          %p534 = scmp.lt.s32.totalorder %s28, 1
          %s535 = scalar_select %p534, %s28, 1
          %s536 = smul.addr %s535, 2
          %s537 = smul.addr %s536, 8
          %s538 = scalar_lea.vmem %s0, %s537
        $region92: #{_ae1_forward_impl.1} parent=87 // pred_fallthru
          _
      $region88: #{_ae1_forward_impl.1} parent=5 // pred_fallthru
        _
      %p539 = scmp.le.s32.totalorder 1, %s28
      %p540 = scmp.lt.s32.totalorder %s28, 3
      %p541 = pnand %p539, %p540
      %p542 = pneg %p541
      // Predicated region
      $region93: #{_ae1_forward_impl.1} parent=5 // pred_check
        _
      $region94: #{_ae1_forward_impl.1} parent=5 // pred_check_branch
        %544 = sbr.rel (%p541) target = $region96
      $region95: #{_ae1_forward_impl.1} parent=5 // pred_region
        %s545 = ssub.s32 %s28, 1
        %p546 = scmp.lt.s32.totalorder %s33, 1
        %s547 = scalar_select %p546, %s33, 1
        %s548 = smul.addr %s547, 2
        %s549 = smul.addr %s548, 8
        %s550 = scalar_lea.vmem %s0, %s549
        %p551 = pneg %p54
        %p552 = pneg %p51
        %p553 = pneg %p75
        %p554 = pneg %p72
        %p555 = pneg %p96
        %p556 = pneg %p93
        %p557 = pneg %p117
        %p558 = pneg %p114
        %p559 = pneg %p138
        %p560 = pneg %p135
        %p561 = pneg %p159
        %p562 = pneg %p156
        %p563 = pneg %p180
        %p564 = pneg %p177
        %p565 = pneg %p201
        %p566 = pneg %p198
        %p567 = pneg %p222
        %p568 = pneg %p219
        %p569 = pneg %p243
        %p570 = pneg %p240
        %p571 = pneg %p264
        %p572 = pneg %p261
        %p573 = pneg %p285
        %p574 = pneg %p282
        %p575 = pneg %p306
        %p576 = pneg %p303
        %p577 = pneg %p327
        %p578 = pneg %p324
        %p579 = pneg %p348
        %p580 = pneg %p345
        %p581 = pneg %p369
        %p582 = pneg %p366
        %p583 = pneg %p390
        %p584 = pneg %p387
        %p585 = pneg %p411
        %p586 = pneg %p408
        %p587 = pneg %p432
        %p588 = pneg %p429
        %p589 = pneg %p458
        %p590 = pneg %p455
        %s591 = sand.u32 %s445, 1
        %s592 = scalar_lea.sflag [#allocation3], %s591
        %s593 = sand.u32 %s445, 1
        %s594 = smul.addr %s593, 16
        %s595 = scalar_lea.vmem [#allocation2], %s594
        %p596 = scmp.lt.s32.totalorder %s33, 1
        %s597 = scalar_select %p596, %s33, 1
        %s598 = smul.addr %s597, 2
        %s599 = smul.addr %s598, 8
        %s600 = scalar_lea.vmem %s0, %s599
        %v601 = vld [vmem:[%s600] sm:$0xff]
        %v602 = vld [vmem:[%s600 + $0x8] sm:$0xff]
        %v603 = vld [vmem:[%s1] sm:$0xff]
        %v604 = vld [vmem:[%s1 + $0x8] sm:$0xff]
        %v605 = vld [vmem:[%s1 + $0x10] sm:$0xff]
        %v606 = vld [vmem:[%s1 + $0x18] sm:$0xff]
        %v607 = vld [vmem:[%s1 + $0x20] sm:$0xff]
        %v608 = vld [vmem:[%s1 + $0x28] sm:$0xff]
        %v609 = vld [vmem:[%s1 + $0x30] sm:$0xff]
        %v610 = vld [vmem:[%s1 + $0x38] sm:$0xff]
        %v611 = vld [vmem:[%s1 + $0x40] sm:$0xff]
        %v612 = vld [vmem:[%s1 + $0x48] sm:$0xff]
        %v613 = vld [vmem:[%s1 + $0x50] sm:$0xff]
        %v614 = vld [vmem:[%s1 + $0x58] sm:$0xff]
        %v615 = vld [vmem:[%s1 + $0x60] sm:$0xff]
        %v616 = vld [vmem:[%s1 + $0x68] sm:$0xff]
        %v617 = vld [vmem:[%s1 + $0x70] sm:$0xff]
        %v618 = vld [vmem:[%s1 + $0x78] sm:$0xff]
        %v619 = vld [vmem:[%s1 + $0x80] sm:$0xff]
        %v620 = vld [vmem:[%s1 + $0x88] sm:$0xff]
        %v621 = vld [vmem:[%s1 + $0x90] sm:$0xff]
        %v622 = vld [vmem:[%s1 + $0x98] sm:$0xff]
        %v623 = vld [vmem:[%s1 + $0xa0] sm:$0xff]
        %v624 = vld [vmem:[%s1 + $0xa8] sm:$0xff]
        %v625 = vld [vmem:[%s1 + $0xb0] sm:$0xff]
        %v626 = vld [vmem:[%s1 + $0xb8] sm:$0xff]
        %v627 = vld [vmem:[%s1 + $0xc0] sm:$0xff]
        %v628 = vld [vmem:[%s10] sm:$0x1]
        %v630 = vlaneseq
        %v631 = vshrl.u32 %v630, 7
        %v632 = vsub.s32 0, %v631
        %v633 = vrot.slane %v628, %v632
        %vm635 = vcmask 588800
        %v637 = vsel %vm635, %v602, 0
        %639 = vmatprep.subr.mxu0 0.0
        %640 = vmatpush1.msra.mxu0 %v603
        %641 = vmatprep.subr.mxu0 0.0
        %642 = vmatpush1.msra.mxu0 %v604
        %643 = vmatprep.subr.mxu0 0.0
        %644 = vmatpush1.msra.mxu0 %v605
        %645 = vmatprep.subr.mxu0 0.0
        %646 = vmatpush1.msra.mxu0 %v606
        %647 = vmatprep.subr.mxu0 0.0
        %648 = vmatpush1.msra.mxu0 %v607
        %649 = vmatprep.subr.mxu0 0.0
        %650 = vmatpush1.msra.mxu0 %v608
        %651 = vmatprep.subr.mxu0 0.0
        %652 = vmatpush1.msra.mxu0 %v609
        %653 = vmatprep.subr.mxu0 0.0
        %654 = vmatpush1.msra.mxu0 %v610
        %655 = vmatprep.subr.mxu0 0.0
        %656 = vmatpush1.msra.mxu0 %v611
        %657 = vmatprep.subr.mxu0 0.0
        %658 = vmatpush1.msra.mxu0 %v612
        %659 = vmatprep.subr.mxu0 0.0
        %660 = vmatpush1.msra.mxu0 %v613
        %661 = vmatprep.subr.mxu0 0.0
        %662 = vmatpush1.msra.mxu0 %v614
        %663 = vmatprep.subr.mxu0 0.0
        %664 = vmatpush1.msra.mxu0 %v615
        %665 = vmatprep.subr.mxu0 0.0
        %666 = vmatpush1.msra.mxu0 %v616
        %667 = vmatprep.subr.mxu0 0.0
        %668 = vmatpush1.msra.mxu0 %v617
        %669 = vmatprep.subr.mxu0 0.0
        %670 = vmatpush1.msra.mxu0 %v618
        %671 = vmatprep.subr.mxu0 0.0
        %672 = vmatpush1.msra.mxu0 %v619
        %673 = vmatprep.subr.mxu0 0.0
        %674 = vmatpush1.msra.mxu0 %v620
        %675 = vmatprep.subr.mxu0 0.0
        %676 = vmatpush1.msra.mxu0 %v621
        %677 = vmatprep.subr.mxu0 0.0
        %678 = vmatpush1.msra.mxu0 %v622
        %679 = vmatprep.subr.mxu0 0.0
        %680 = vmatpush1.msra.mxu0 %v623
        %681 = vmatprep.subr.mxu0 0.0
        %682 = vmatpush1.msra.mxu0 %v624
        %683 = vmatprep.subr.mxu0 0.0
        %684 = vmatpush1.msra.mxu0 %v625
        %685 = vmatprep.subr.mxu0 0.0
        %686 = vmatpush1.msra.mxu0 %v626
        %687 = vmatprep.subr.mxu0 0.0
        %688 = vmatpush1.msra.mxu0 %v627
        %689 = vmatprep.subr.mxu0 0.0
        %690 = vmatpush1.msra.mxu0 0.0
        %691 = vmatprep.subr.mxu0 0.0
        %692 = vmatpush1.msra.mxu0 0.0
        %693 = vmatprep.subr.mxu0 0.0
        %694 = vmatpush1.msra.mxu0 0.0
        %695 = vmatprep.subr.mxu0 0.0
        %696 = vmatpush1.msra.mxu0 0.0
        %697 = vmatprep.subr.mxu0 0.0
        %698 = vmatpush1.msra.mxu0 0.0
        %699 = vmatprep.subr.mxu0 0.0
        %700 = vmatpush1.msra.mxu0 0.0
        %701 = vmatprep.subr.mxu0 0.0
        %702 = vmatpush1.msra.mxu0 0.0
        %703 = vmatprep.mubr.f32.mxu0 %v637
        %704 = vmatmul.mubr.f32.gmra.mrb[0].mxu0 %v601
        %v705 = vpop.f32.mrb[0].mxu0
        %v706 = vadd.f32 %v633, %v705
        %v707 = vpop.f32.mrb[0].mxu0
        %708 = vdwg.mxu0
        %v709 = vmax.f32 %v706, 0.0
        %v710 = vld [vmem:[%s2] sm:$0xff]
        %v711 = vld [vmem:[%s2 + $0x8] sm:$0xff]
        %v712 = vld [vmem:[%s2 + $0x10] sm:$0xff]
        %v713 = vld [vmem:[%s2 + $0x18] sm:$0xff]
        %v714 = vld [vmem:[%s2 + $0x20] sm:$0xff]
        %v715 = vld [vmem:[%s2 + $0x28] sm:$0xff]
        %v716 = vld [vmem:[%s2 + $0x30] sm:$0xff]
        %v717 = vld [vmem:[%s2 + $0x38] sm:$0xff]
        %v718 = vld [vmem:[%s11] sm:$0x1]
        %v720 = vlaneseq
        %v721 = vshrl.u32 %v720, 7
        %v722 = vsub.s32 0, %v721
        %v723 = vrot.slane %v718, %v722
        %vm725 = vcmask 523264
        %v727 = vsel %vm725, %v709, 0
        %729 = vmatprep.subr.mxu0 0.0
        %730 = vmatpush1.msra.mxu0 %v710
        %731 = vmatprep.subr.mxu0 0.0
        %732 = vmatpush1.msra.mxu0 %v711
        %733 = vmatprep.subr.mxu0 0.0
        %734 = vmatpush1.msra.mxu0 %v712
        %735 = vmatprep.subr.mxu0 0.0
        %736 = vmatpush1.msra.mxu0 %v713
        %737 = vmatprep.subr.mxu0 0.0
        %738 = vmatpush1.msra.mxu0 %v714
        %739 = vmatprep.subr.mxu0 0.0
        %740 = vmatpush1.msra.mxu0 %v715
        %741 = vmatprep.subr.mxu0 0.0
        %742 = vmatpush1.msra.mxu0 %v716
        %743 = vmatprep.subr.mxu0 0.0
        %744 = vmatpush1.msra.mxu0 %v717
        %745 = vmatprep.subr.mxu0 0.0
        %746 = vmatpush1.msra.mxu0 0.0
        %747 = vmatprep.subr.mxu0 0.0
        %748 = vmatpush1.msra.mxu0 0.0
        %749 = vmatprep.subr.mxu0 0.0
        %750 = vmatpush1.msra.mxu0 0.0
        %751 = vmatprep.subr.mxu0 0.0
        %752 = vmatpush1.msra.mxu0 0.0
        %753 = vmatprep.subr.mxu0 0.0
        %754 = vmatpush1.msra.mxu0 0.0
        %755 = vmatprep.subr.mxu0 0.0
        %756 = vmatpush1.msra.mxu0 0.0
        %757 = vmatprep.subr.mxu0 0.0
        %758 = vmatpush1.msra.mxu0 0.0
        %759 = vmatprep.subr.mxu0 0.0
        %760 = vmatpush1.msra.mxu0 0.0
        %761 = vmatprep.subr.mxu0 0.0
        %762 = vmatpush1.msra.mxu0 0.0
        %763 = vmatprep.subr.mxu0 0.0
        %764 = vmatpush1.msra.mxu0 0.0
        %765 = vmatprep.subr.mxu0 0.0
        %766 = vmatpush1.msra.mxu0 0.0
        %767 = vmatprep.subr.mxu0 0.0
        %768 = vmatpush1.msra.mxu0 0.0
        %769 = vmatprep.subr.mxu0 0.0
        %770 = vmatpush1.msra.mxu0 0.0
        %771 = vmatprep.subr.mxu0 0.0
        %772 = vmatpush1.msra.mxu0 0.0
        %773 = vmatprep.subr.mxu0 0.0
        %774 = vmatpush1.msra.mxu0 0.0
        %775 = vmatprep.subr.mxu0 0.0
        %776 = vmatpush1.msra.mxu0 0.0
        %777 = vmatprep.subr.mxu0 0.0
        %778 = vmatpush1.msra.mxu0 0.0
        %779 = vmatprep.subr.mxu0 0.0
        %780 = vmatpush1.msra.mxu0 0.0
        %781 = vmatprep.subr.mxu0 0.0
        %782 = vmatpush1.msra.mxu0 0.0
        %783 = vmatprep.subr.mxu0 0.0
        %784 = vmatpush1.msra.mxu0 0.0
        %785 = vmatprep.subr.mxu0 0.0
        %786 = vmatpush1.msra.mxu0 0.0
        %787 = vmatprep.subr.mxu0 0.0
        %788 = vmatpush1.msra.mxu0 0.0
        %789 = vmatprep.subr.mxu0 0.0
        %790 = vmatpush1.msra.mxu0 0.0
        %791 = vmatprep.subr.mxu0 0.0
        %792 = vmatpush1.msra.mxu0 0.0
        %793 = vmatprep.mubr.f32.mxu0 0.0
        %794 = vmatmul.mubr.f32.gmra.mrb[0].mxu0 %v727
        %v795 = vpop.f32.mrb[0].mxu0
        %v796 = vadd.f32 %v723, %v795
        %v797 = vpop.f32.mrb[0].mxu0
        %798 = vdwg.mxu0
        %v799 = vmax.f32 %v796, 0.0
        %v800 = vld [vmem:[%s3] sm:$0xff]
        %v801 = vld [vmem:[%s3 + $0x8] sm:$0xff]
        %v802 = vld [vmem:[%s3 + $0x10] sm:$0xff]
        %v803 = vld [vmem:[%s3 + $0x18] sm:$0xff]
        %v804 = vld [vmem:[%s12] sm:$0x1]
        %v806 = vlaneseq
        %v807 = vshrl.u32 %v806, 7
        %v808 = vsub.s32 0, %v807
        %v809 = vrot.slane %v804, %v808
        %vm811 = vcmask 261120
        %v813 = vsel %vm811, %v799, 0
        %815 = vmatprep.subr.mxu0 0.0
        %816 = vmatpush1.msra.mxu0 %v800
        %817 = vmatprep.subr.mxu0 0.0
        %818 = vmatpush1.msra.mxu0 %v801
        %819 = vmatprep.subr.mxu0 0.0
        %820 = vmatpush1.msra.mxu0 %v802
        %821 = vmatprep.subr.mxu0 0.0
        %822 = vmatpush1.msra.mxu0 %v803
        %823 = vmatprep.subr.mxu0 0.0
        %824 = vmatpush1.msra.mxu0 0.0
        %825 = vmatprep.subr.mxu0 0.0
        %826 = vmatpush1.msra.mxu0 0.0
        %827 = vmatprep.subr.mxu0 0.0
        %828 = vmatpush1.msra.mxu0 0.0
        %829 = vmatprep.subr.mxu0 0.0
        %830 = vmatpush1.msra.mxu0 0.0
        %831 = vmatprep.subr.mxu0 0.0
        %832 = vmatpush1.msra.mxu0 0.0
        %833 = vmatprep.subr.mxu0 0.0
        %834 = vmatpush1.msra.mxu0 0.0
        %835 = vmatprep.subr.mxu0 0.0
        %836 = vmatpush1.msra.mxu0 0.0
        %837 = vmatprep.subr.mxu0 0.0
        %838 = vmatpush1.msra.mxu0 0.0
        %839 = vmatprep.subr.mxu0 0.0
        %840 = vmatpush1.msra.mxu0 0.0
        %841 = vmatprep.subr.mxu0 0.0
        %842 = vmatpush1.msra.mxu0 0.0
        %843 = vmatprep.subr.mxu0 0.0
        %844 = vmatpush1.msra.mxu0 0.0
        %845 = vmatprep.subr.mxu0 0.0
        %846 = vmatpush1.msra.mxu0 0.0
        %847 = vmatprep.subr.mxu0 0.0
        %848 = vmatpush1.msra.mxu0 0.0
        %849 = vmatprep.subr.mxu0 0.0
        %850 = vmatpush1.msra.mxu0 0.0
        %851 = vmatprep.subr.mxu0 0.0
        %852 = vmatpush1.msra.mxu0 0.0
        %853 = vmatprep.subr.mxu0 0.0
        %854 = vmatpush1.msra.mxu0 0.0
        %855 = vmatprep.subr.mxu0 0.0
        %856 = vmatpush1.msra.mxu0 0.0
        %857 = vmatprep.subr.mxu0 0.0
        %858 = vmatpush1.msra.mxu0 0.0
        %859 = vmatprep.subr.mxu0 0.0
        %860 = vmatpush1.msra.mxu0 0.0
        %861 = vmatprep.subr.mxu0 0.0
        %862 = vmatpush1.msra.mxu0 0.0
        %863 = vmatprep.subr.mxu0 0.0
        %864 = vmatpush1.msra.mxu0 0.0
        %865 = vmatprep.subr.mxu0 0.0
        %866 = vmatpush1.msra.mxu0 0.0
        %867 = vmatprep.subr.mxu0 0.0
        %868 = vmatpush1.msra.mxu0 0.0
        %869 = vmatprep.subr.mxu0 0.0
        %870 = vmatpush1.msra.mxu0 0.0
        %871 = vmatprep.subr.mxu0 0.0
        %872 = vmatpush1.msra.mxu0 0.0
        %873 = vmatprep.subr.mxu0 0.0
        %874 = vmatpush1.msra.mxu0 0.0
        %875 = vmatprep.subr.mxu0 0.0
        %876 = vmatpush1.msra.mxu0 0.0
        %877 = vmatprep.subr.mxu0 0.0
        %878 = vmatpush1.msra.mxu0 0.0
        %879 = vmatprep.mubr.f32.mxu0 0.0
        %880 = vmatmul.mubr.f32.gmra.mrb[0].mxu0 %v813
        %v881 = vpop.f32.mrb[0].mxu0
        %v882 = vadd.f32 %v809, %v881
        %v883 = vpop.f32.mrb[0].mxu0
        %884 = vdwg.mxu0
        %v885 = vmax.f32 %v882, 0.0
        %v886 = vld [vmem:[%s4] sm:$0xff]
        %v887 = vld [vmem:[%s4 + $0x8] sm:$0xff]
        %v888 = vld [vmem:[%s13] sm:$0x1]
        %v890 = vlaneseq
        %v891 = vshrl.u32 %v890, 7
        %v892 = vsub.s32 0, %v891
        %v893 = vrot.slane %v888, %v892
        %vm895 = vcmask 130048
        %v897 = vsel %vm895, %v885, 0
        %899 = vmatprep.subr.mxu0 0.0
        %900 = vmatpush1.msra.mxu0 %v886
        %901 = vmatprep.subr.mxu0 0.0
        %902 = vmatpush1.msra.mxu0 %v887
        %903 = vmatprep.subr.mxu0 0.0
        %904 = vmatpush1.msra.mxu0 0.0
        %905 = vmatprep.subr.mxu0 0.0
        %906 = vmatpush1.msra.mxu0 0.0
        %907 = vmatprep.subr.mxu0 0.0
        %908 = vmatpush1.msra.mxu0 0.0
        %909 = vmatprep.subr.mxu0 0.0
        %910 = vmatpush1.msra.mxu0 0.0
        %911 = vmatprep.subr.mxu0 0.0
        %912 = vmatpush1.msra.mxu0 0.0
        %913 = vmatprep.subr.mxu0 0.0
        %914 = vmatpush1.msra.mxu0 0.0
        %915 = vmatprep.subr.mxu0 0.0
        %916 = vmatpush1.msra.mxu0 0.0
        %917 = vmatprep.subr.mxu0 0.0
        %918 = vmatpush1.msra.mxu0 0.0
        %919 = vmatprep.subr.mxu0 0.0
        %920 = vmatpush1.msra.mxu0 0.0
        %921 = vmatprep.subr.mxu0 0.0
        %922 = vmatpush1.msra.mxu0 0.0
        %923 = vmatprep.subr.mxu0 0.0
        %924 = vmatpush1.msra.mxu0 0.0
        %925 = vmatprep.subr.mxu0 0.0
        %926 = vmatpush1.msra.mxu0 0.0
        %927 = vmatprep.subr.mxu0 0.0
        %928 = vmatpush1.msra.mxu0 0.0
        %929 = vmatprep.subr.mxu0 0.0
        %930 = vmatpush1.msra.mxu0 0.0
        %931 = vmatprep.subr.mxu0 0.0
        %932 = vmatpush1.msra.mxu0 0.0
        %933 = vmatprep.subr.mxu0 0.0
        %934 = vmatpush1.msra.mxu0 0.0
        %935 = vmatprep.subr.mxu0 0.0
        %936 = vmatpush1.msra.mxu0 0.0
        %937 = vmatprep.subr.mxu0 0.0
        %938 = vmatpush1.msra.mxu0 0.0
        %939 = vmatprep.subr.mxu0 0.0
        %940 = vmatpush1.msra.mxu0 0.0
        %941 = vmatprep.subr.mxu0 0.0
        %942 = vmatpush1.msra.mxu0 0.0
        %943 = vmatprep.subr.mxu0 0.0
        %944 = vmatpush1.msra.mxu0 0.0
        %945 = vmatprep.subr.mxu0 0.0
        %946 = vmatpush1.msra.mxu0 0.0
        %947 = vmatprep.subr.mxu0 0.0
        %948 = vmatpush1.msra.mxu0 0.0
        %949 = vmatprep.subr.mxu0 0.0
        %950 = vmatpush1.msra.mxu0 0.0
        %951 = vmatprep.subr.mxu0 0.0
        %952 = vmatpush1.msra.mxu0 0.0
        %953 = vmatprep.subr.mxu0 0.0
        %954 = vmatpush1.msra.mxu0 0.0
        %955 = vmatprep.subr.mxu0 0.0
        %956 = vmatpush1.msra.mxu0 0.0
        %957 = vmatprep.subr.mxu0 0.0
        %958 = vmatpush1.msra.mxu0 0.0
        %959 = vmatprep.subr.mxu0 0.0
        %960 = vmatpush1.msra.mxu0 0.0
        %961 = vmatprep.subr.mxu0 0.0
        %962 = vmatpush1.msra.mxu0 0.0
        %963 = vmatprep.mubr.f32.mxu0 0.0
        %964 = vmatmul.mubr.f32.gmra.mrb[0].mxu0 %v897
        %v965 = vpop.f32.mrb[0].mxu0
        %v966 = vadd.f32 %v893, %v965
        %v967 = vpop.f32.mrb[0].mxu0
        %968 = vdwg.mxu0
        %v969 = vmax.f32 %v966, 0.0
        %v970 = vld [vmem:[%s5] sm:$0xff]
        %v971 = vld [vmem:[%s14] sm:$0x1]
        %v973 = vlaneseq
        %v974 = vshrl.u32 %v973, 7
        %v975 = vsub.s32 0, %v974
        %v976 = vrot.slane %v971, %v975
        %vm978 = vcmask 64512
        %v980 = vsel %vm978, %v969, 0
        %982 = vmatprep.subr.mxu0 0.0
        %983 = vmatpush1.msra.mxu0 %v970
        %984 = vmatprep.subr.mxu0 0.0
        %985 = vmatpush1.msra.mxu0 0.0
        %986 = vmatprep.subr.mxu0 0.0
        %987 = vmatpush1.msra.mxu0 0.0
        %988 = vmatprep.subr.mxu0 0.0
        %989 = vmatpush1.msra.mxu0 0.0
        %990 = vmatprep.subr.mxu0 0.0
        %991 = vmatpush1.msra.mxu0 0.0
        %992 = vmatprep.subr.mxu0 0.0
        %993 = vmatpush1.msra.mxu0 0.0
        %994 = vmatprep.subr.mxu0 0.0
        %995 = vmatpush1.msra.mxu0 0.0
        %996 = vmatprep.subr.mxu0 0.0
        %997 = vmatpush1.msra.mxu0 0.0
        %998 = vmatprep.subr.mxu0 0.0
        %999 = vmatpush1.msra.mxu0 0.0
        %1000 = vmatprep.subr.mxu0 0.0
        %1001 = vmatpush1.msra.mxu0 0.0
        %1002 = vmatprep.subr.mxu0 0.0
        %1003 = vmatpush1.msra.mxu0 0.0
        %1004 = vmatprep.subr.mxu0 0.0
        %1005 = vmatpush1.msra.mxu0 0.0
        %1006 = vmatprep.subr.mxu0 0.0
        %1007 = vmatpush1.msra.mxu0 0.0
        %1008 = vmatprep.subr.mxu0 0.0
        %1009 = vmatpush1.msra.mxu0 0.0
        %1010 = vmatprep.subr.mxu0 0.0
        %1011 = vmatpush1.msra.mxu0 0.0
        %1012 = vmatprep.subr.mxu0 0.0
        %1013 = vmatpush1.msra.mxu0 0.0
        %1014 = vmatprep.subr.mxu0 0.0
        %1015 = vmatpush1.msra.mxu0 0.0
        %1016 = vmatprep.subr.mxu0 0.0
        %1017 = vmatpush1.msra.mxu0 0.0
        %1018 = vmatprep.subr.mxu0 0.0
        %1019 = vmatpush1.msra.mxu0 0.0
        %1020 = vmatprep.subr.mxu0 0.0
        %1021 = vmatpush1.msra.mxu0 0.0
        %1022 = vmatprep.subr.mxu0 0.0
        %1023 = vmatpush1.msra.mxu0 0.0
        %1024 = vmatprep.subr.mxu0 0.0
        %1025 = vmatpush1.msra.mxu0 0.0
        %1026 = vmatprep.subr.mxu0 0.0
        %1027 = vmatpush1.msra.mxu0 0.0
        %1028 = vmatprep.subr.mxu0 0.0
        %1029 = vmatpush1.msra.mxu0 0.0
        %1030 = vmatprep.subr.mxu0 0.0
        %1031 = vmatpush1.msra.mxu0 0.0
        %1032 = vmatprep.subr.mxu0 0.0
        %1033 = vmatpush1.msra.mxu0 0.0
        %1034 = vmatprep.subr.mxu0 0.0
        %1035 = vmatpush1.msra.mxu0 0.0
        %1036 = vmatprep.subr.mxu0 0.0
        %1037 = vmatpush1.msra.mxu0 0.0
        %1038 = vmatprep.subr.mxu0 0.0
        %1039 = vmatpush1.msra.mxu0 0.0
        %1040 = vmatprep.subr.mxu0 0.0
        %1041 = vmatpush1.msra.mxu0 0.0
        %1042 = vmatprep.subr.mxu0 0.0
        %1043 = vmatpush1.msra.mxu0 0.0
        %1044 = vmatprep.subr.mxu0 0.0
        %1045 = vmatpush1.msra.mxu0 0.0
        %1046 = vmatprep.mubr.f32.mxu0 0.0
        %1047 = vmatmul.mubr.f32.gmra.mrb[0].mxu0 %v980
        %v1048 = vpop.f32.mrb[0].mxu0
        %v1049 = vadd.f32 %v976, %v1048
        %v1050 = vpop.f32.mrb[0].mxu0
        %1051 = vdwg.mxu0
        %v1052 = vmax.f32 %v1049, 0.0
        %v1053 = vld [vmem:[%s6] sm:$0xff]
        %v1054 = vld [vmem:[%s15] sm:$0x1]
        %v1056 = vlaneseq
        %v1057 = vshrl.u32 %v1056, 7
        %v1058 = vsub.s32 0, %v1057
        %v1059 = vrot.slane %v1054, %v1058
        %v1062 = vsel %vm978, %v1052, 0
        %1064 = vmatprep.subr.mxu0 0.0
        %1065 = vmatpush1.msra.mxu0 %v1053
        %1066 = vmatprep.subr.mxu0 0.0
        %1067 = vmatpush1.msra.mxu0 0.0
        %1068 = vmatprep.subr.mxu0 0.0
        %1069 = vmatpush1.msra.mxu0 0.0
        %1070 = vmatprep.subr.mxu0 0.0
        %1071 = vmatpush1.msra.mxu0 0.0
        %1072 = vmatprep.subr.mxu0 0.0
        %1073 = vmatpush1.msra.mxu0 0.0
        %1074 = vmatprep.subr.mxu0 0.0
        %1075 = vmatpush1.msra.mxu0 0.0
        %1076 = vmatprep.subr.mxu0 0.0
        %1077 = vmatpush1.msra.mxu0 0.0
        %1078 = vmatprep.subr.mxu0 0.0
        %1079 = vmatpush1.msra.mxu0 0.0
        %1080 = vmatprep.subr.mxu0 0.0
        %1081 = vmatpush1.msra.mxu0 0.0
        %1082 = vmatprep.subr.mxu0 0.0
        %1083 = vmatpush1.msra.mxu0 0.0
        %1084 = vmatprep.subr.mxu0 0.0
        %1085 = vmatpush1.msra.mxu0 0.0
        %1086 = vmatprep.subr.mxu0 0.0
        %1087 = vmatpush1.msra.mxu0 0.0
        %1088 = vmatprep.subr.mxu0 0.0
        %1089 = vmatpush1.msra.mxu0 0.0
        %1090 = vmatprep.subr.mxu0 0.0
        %1091 = vmatpush1.msra.mxu0 0.0
        %1092 = vmatprep.subr.mxu0 0.0
        %1093 = vmatpush1.msra.mxu0 0.0
        %1094 = vmatprep.subr.mxu0 0.0
        %1095 = vmatpush1.msra.mxu0 0.0
        %1096 = vmatprep.subr.mxu0 0.0
        %1097 = vmatpush1.msra.mxu0 0.0
        %1098 = vmatprep.subr.mxu0 0.0
        %1099 = vmatpush1.msra.mxu0 0.0
        %1100 = vmatprep.subr.mxu0 0.0
        %1101 = vmatpush1.msra.mxu0 0.0
        %1102 = vmatprep.subr.mxu0 0.0
        %1103 = vmatpush1.msra.mxu0 0.0
        %1104 = vmatprep.subr.mxu0 0.0
        %1105 = vmatpush1.msra.mxu0 0.0
        %1106 = vmatprep.subr.mxu0 0.0
        %1107 = vmatpush1.msra.mxu0 0.0
        %1108 = vmatprep.subr.mxu0 0.0
        %1109 = vmatpush1.msra.mxu0 0.0
        %1110 = vmatprep.subr.mxu0 0.0
        %1111 = vmatpush1.msra.mxu0 0.0
        %1112 = vmatprep.subr.mxu0 0.0
        %1113 = vmatpush1.msra.mxu0 0.0
        %1114 = vmatprep.subr.mxu0 0.0
        %1115 = vmatpush1.msra.mxu0 0.0
        %1116 = vmatprep.subr.mxu0 0.0
        %1117 = vmatpush1.msra.mxu0 0.0
        %1118 = vmatprep.subr.mxu0 0.0
        %1119 = vmatpush1.msra.mxu0 0.0
        %1120 = vmatprep.subr.mxu0 0.0
        %1121 = vmatpush1.msra.mxu0 0.0
        %1122 = vmatprep.subr.mxu0 0.0
        %1123 = vmatpush1.msra.mxu0 0.0
        %1124 = vmatprep.subr.mxu0 0.0
        %1125 = vmatpush1.msra.mxu0 0.0
        %1126 = vmatprep.subr.mxu0 0.0
        %1127 = vmatpush1.msra.mxu0 0.0
        %1128 = vmatprep.mubr.f32.mxu0 0.0
        %1129 = vmatmul.mubr.f32.gmra.mrb[0].mxu0 %v1062
        %v1130 = vpop.f32.mrb[0].mxu0
        %v1131 = vadd.f32 %v1059, %v1130
        %v1132 = vpop.f32.mrb[0].mxu0
        %1133 = vdwg.mxu0
        %v1134 = vmax.f32 %v1131, 0.0
        %v1135 = vld [vmem:[%s7] sm:$0xff]
        %v1136 = vld [vmem:[%s7 + $0x8] sm:$0xff]
        %v1137 = vld [vmem:[%s16] sm:$0x1]
        %v1139 = vlaneseq
        %v1140 = vshrl.u32 %v1139, 7
        %v1141 = vsub.s32 0, %v1140
        %v1142 = vrot.slane %v1137, %v1141
        %v1145 = vsel %vm895, %v1134, 0
        %1147 = vmatprep.subr.mxu0 0.0
        %1148 = vmatpush1.msra.mxu0 %v1135
        %1149 = vmatprep.subr.mxu0 0.0
        %1150 = vmatpush1.msra.mxu0 %v1136
        %1151 = vmatprep.subr.mxu0 0.0
        %1152 = vmatpush1.msra.mxu0 0.0
        %1153 = vmatprep.subr.mxu0 0.0
        %1154 = vmatpush1.msra.mxu0 0.0
        %1155 = vmatprep.subr.mxu0 0.0
        %1156 = vmatpush1.msra.mxu0 0.0
        %1157 = vmatprep.subr.mxu0 0.0
        %1158 = vmatpush1.msra.mxu0 0.0
        %1159 = vmatprep.subr.mxu0 0.0
        %1160 = vmatpush1.msra.mxu0 0.0
        %1161 = vmatprep.subr.mxu0 0.0
        %1162 = vmatpush1.msra.mxu0 0.0
        %1163 = vmatprep.subr.mxu0 0.0
        %1164 = vmatpush1.msra.mxu0 0.0
        %1165 = vmatprep.subr.mxu0 0.0
        %1166 = vmatpush1.msra.mxu0 0.0
        %1167 = vmatprep.subr.mxu0 0.0
        %1168 = vmatpush1.msra.mxu0 0.0
        %1169 = vmatprep.subr.mxu0 0.0
        %1170 = vmatpush1.msra.mxu0 0.0
        %1171 = vmatprep.subr.mxu0 0.0
        %1172 = vmatpush1.msra.mxu0 0.0
        %1173 = vmatprep.subr.mxu0 0.0
        %1174 = vmatpush1.msra.mxu0 0.0
        %1175 = vmatprep.subr.mxu0 0.0
        %1176 = vmatpush1.msra.mxu0 0.0
        %1177 = vmatprep.subr.mxu0 0.0
        %1178 = vmatpush1.msra.mxu0 0.0
        %1179 = vmatprep.subr.mxu0 0.0
        %1180 = vmatpush1.msra.mxu0 0.0
        %1181 = vmatprep.subr.mxu0 0.0
        %1182 = vmatpush1.msra.mxu0 0.0
        %1183 = vmatprep.subr.mxu0 0.0
        %1184 = vmatpush1.msra.mxu0 0.0
        %1185 = vmatprep.subr.mxu0 0.0
        %1186 = vmatpush1.msra.mxu0 0.0
        %1187 = vmatprep.subr.mxu0 0.0
        %1188 = vmatpush1.msra.mxu0 0.0
        %1189 = vmatprep.subr.mxu0 0.0
        %1190 = vmatpush1.msra.mxu0 0.0
        %1191 = vmatprep.subr.mxu0 0.0
        %1192 = vmatpush1.msra.mxu0 0.0
        %1193 = vmatprep.subr.mxu0 0.0
        %1194 = vmatpush1.msra.mxu0 0.0
        %1195 = vmatprep.subr.mxu0 0.0
        %1196 = vmatpush1.msra.mxu0 0.0
        %1197 = vmatprep.subr.mxu0 0.0
        %1198 = vmatpush1.msra.mxu0 0.0
        %1199 = vmatprep.subr.mxu0 0.0
        %1200 = vmatpush1.msra.mxu0 0.0
        %1201 = vmatprep.subr.mxu0 0.0
        %1202 = vmatpush1.msra.mxu0 0.0
        %1203 = vmatprep.subr.mxu0 0.0
        %1204 = vmatpush1.msra.mxu0 0.0
        %1205 = vmatprep.subr.mxu0 0.0
        %1206 = vmatpush1.msra.mxu0 0.0
        %1207 = vmatprep.subr.mxu0 0.0
        %1208 = vmatpush1.msra.mxu0 0.0
        %1209 = vmatprep.subr.mxu0 0.0
        %1210 = vmatpush1.msra.mxu0 0.0
        %1211 = vmatprep.mubr.f32.mxu0 0.0
        %1212 = vmatmul.mubr.f32.gmra.mrb[0].mxu0 %v1145
        %v1213 = vpop.f32.mrb[0].mxu0
        %v1214 = vadd.f32 %v1142, %v1213
        %v1215 = vpop.f32.mrb[0].mxu0
        %1216 = vdwg.mxu0
        %v1217 = vmax.f32 %v1214, 0.0
        %v1218 = vld [vmem:[%s8] sm:$0xff]
        %v1219 = vld [vmem:[%s8 + $0x8] sm:$0xff]
        %v1220 = vld [vmem:[%s8 + $0x10] sm:$0xff]
        %v1221 = vld [vmem:[%s8 + $0x18] sm:$0xff]
        %v1222 = vld [vmem:[%s17] sm:$0x1]
        %v1224 = vlaneseq
        %v1225 = vshrl.u32 %v1224, 7
        %v1226 = vsub.s32 0, %v1225
        %v1227 = vrot.slane %v1222, %v1226
        %v1230 = vsel %vm811, %v1217, 0
        %1232 = vmatprep.subr.mxu0 0.0
        %1233 = vmatpush1.msra.mxu0 %v1218
        %1234 = vmatprep.subr.mxu0 0.0
        %1235 = vmatpush1.msra.mxu0 %v1219
        %1236 = vmatprep.subr.mxu0 0.0
        %1237 = vmatpush1.msra.mxu0 %v1220
        %1238 = vmatprep.subr.mxu0 0.0
        %1239 = vmatpush1.msra.mxu0 %v1221
        %1240 = vmatprep.subr.mxu0 0.0
        %1241 = vmatpush1.msra.mxu0 0.0
        %1242 = vmatprep.subr.mxu0 0.0
        %1243 = vmatpush1.msra.mxu0 0.0
        %1244 = vmatprep.subr.mxu0 0.0
        %1245 = vmatpush1.msra.mxu0 0.0
        %1246 = vmatprep.subr.mxu0 0.0
        %1247 = vmatpush1.msra.mxu0 0.0
        %1248 = vmatprep.subr.mxu0 0.0
        %1249 = vmatpush1.msra.mxu0 0.0
        %1250 = vmatprep.subr.mxu0 0.0
        %1251 = vmatpush1.msra.mxu0 0.0
        %1252 = vmatprep.subr.mxu0 0.0
        %1253 = vmatpush1.msra.mxu0 0.0
        %1254 = vmatprep.subr.mxu0 0.0
        %1255 = vmatpush1.msra.mxu0 0.0
        %1256 = vmatprep.subr.mxu0 0.0
        %1257 = vmatpush1.msra.mxu0 0.0
        %1258 = vmatprep.subr.mxu0 0.0
        %1259 = vmatpush1.msra.mxu0 0.0
        %1260 = vmatprep.subr.mxu0 0.0
        %1261 = vmatpush1.msra.mxu0 0.0
        %1262 = vmatprep.subr.mxu0 0.0
        %1263 = vmatpush1.msra.mxu0 0.0
        %1264 = vmatprep.subr.mxu0 0.0
        %1265 = vmatpush1.msra.mxu0 0.0
        %1266 = vmatprep.subr.mxu0 0.0
        %1267 = vmatpush1.msra.mxu0 0.0
        %1268 = vmatprep.subr.mxu0 0.0
        %1269 = vmatpush1.msra.mxu0 0.0
        %1270 = vmatprep.subr.mxu0 0.0
        %1271 = vmatpush1.msra.mxu0 0.0
        %1272 = vmatprep.subr.mxu0 0.0
        %1273 = vmatpush1.msra.mxu0 0.0
        %1274 = vmatprep.subr.mxu0 0.0
        %1275 = vmatpush1.msra.mxu0 0.0
        %1276 = vmatprep.subr.mxu0 0.0
        %1277 = vmatpush1.msra.mxu0 0.0
        %1278 = vmatprep.subr.mxu0 0.0
        %1279 = vmatpush1.msra.mxu0 0.0
        %1280 = vmatprep.subr.mxu0 0.0
        %1281 = vmatpush1.msra.mxu0 0.0
        %1282 = vmatprep.subr.mxu0 0.0
        %1283 = vmatpush1.msra.mxu0 0.0
        %1284 = vmatprep.subr.mxu0 0.0
        %1285 = vmatpush1.msra.mxu0 0.0
        %1286 = vmatprep.subr.mxu0 0.0
        %1287 = vmatpush1.msra.mxu0 0.0
        %1288 = vmatprep.subr.mxu0 0.0
        %1289 = vmatpush1.msra.mxu0 0.0
        %1290 = vmatprep.subr.mxu0 0.0
        %1291 = vmatpush1.msra.mxu0 0.0
        %1292 = vmatprep.subr.mxu0 0.0
        %1293 = vmatpush1.msra.mxu0 0.0
        %1294 = vmatprep.subr.mxu0 0.0
        %1295 = vmatpush1.msra.mxu0 0.0
        %1296 = vmatprep.mubr.f32.mxu0 0.0
        %1297 = vmatmul.mubr.f32.gmra.mrb[0].mxu0 %v1230
        %v1298 = vpop.f32.mrb[0].mxu0
        %v1299 = vadd.f32 %v1227, %v1298
        %v1300 = vpop.f32.mrb[0].mxu0
        %1301 = vdwg.mxu0
        %v1302 = vmax.f32 %v1299, 0.0
        %v1303 = vld [vmem:[%s9] sm:$0xff]
        %v1304 = vld [vmem:[%s9 + $0x8] sm:$0xff]
        %v1305 = vld [vmem:[%s9 + $0x10] sm:$0xff]
        %v1306 = vld [vmem:[%s9 + $0x18] sm:$0xff]
        %v1307 = vld [vmem:[%s9 + $0x20] sm:$0xff]
        %v1308 = vld [vmem:[%s9 + $0x28] sm:$0xff]
        %v1309 = vld [vmem:[%s9 + $0x30] sm:$0xff]
        %v1310 = vld [vmem:[%s9 + $0x38] sm:$0xff]
        %v1311 = vld [vmem:[%s9 + $0x40] sm:$0xff]
        %v1312 = vld [vmem:[%s9 + $0x48] sm:$0xff]
        %v1313 = vld [vmem:[%s9 + $0x50] sm:$0xff]
        %v1314 = vld [vmem:[%s9 + $0x58] sm:$0xff]
        %v1315 = vld [vmem:[%s9 + $0x60] sm:$0xff]
        %v1316 = vld [vmem:[%s9 + $0x68] sm:$0xff]
        %v1317 = vld [vmem:[%s9 + $0x70] sm:$0xff]
        %v1318 = vld [vmem:[%s9 + $0x78] sm:$0xff]
        %v1319 = vld [vmem:[%s18] sm:$0x3]
        %v1321 = vlaneseq
        %v1322 = vshrl.u32 %v1321, 7
        %v1323 = vsub.s32 0, %v1322
        %v1324 = vrot.slane %v1319, %v1323
        %v1325 = vlaneseq
        %v1326 = vshrl.u32 %v1325, 7
        %v1327 = vsub.s32 1, %v1326
        %v1328 = vrot.slane %v1319, %v1327
        %v1332 = vsel %vm725, %v1302, 0
        %1334 = vmatprep.subr.mxu0 %v1304
        %1335 = vmatpush1.msra.mxu0 %v1303
        %1336 = vmatprep.subr.mxu0 %v1306
        %1337 = vmatpush1.msra.mxu0 %v1305
        %1338 = vmatprep.subr.mxu0 %v1308
        %1339 = vmatpush1.msra.mxu0 %v1307
        %1340 = vmatprep.subr.mxu0 %v1310
        %1341 = vmatpush1.msra.mxu0 %v1309
        %1342 = vmatprep.subr.mxu0 %v1312
        %1343 = vmatpush1.msra.mxu0 %v1311
        %1344 = vmatprep.subr.mxu0 %v1314
        %1345 = vmatpush1.msra.mxu0 %v1313
        %1346 = vmatprep.subr.mxu0 %v1316
        %1347 = vmatpush1.msra.mxu0 %v1315
        %1348 = vmatprep.subr.mxu0 %v1318
        %1349 = vmatpush1.msra.mxu0 %v1317
        %1350 = vmatprep.subr.mxu0 0.0
        %1351 = vmatpush1.msra.mxu0 0.0
        %1352 = vmatprep.subr.mxu0 0.0
        %1353 = vmatpush1.msra.mxu0 0.0
        %1354 = vmatprep.subr.mxu0 0.0
        %1355 = vmatpush1.msra.mxu0 0.0
        %1356 = vmatprep.subr.mxu0 0.0
        %1357 = vmatpush1.msra.mxu0 0.0
        %1358 = vmatprep.subr.mxu0 0.0
        %1359 = vmatpush1.msra.mxu0 0.0
        %1360 = vmatprep.subr.mxu0 0.0
        %1361 = vmatpush1.msra.mxu0 0.0
        %1362 = vmatprep.subr.mxu0 0.0
        %1363 = vmatpush1.msra.mxu0 0.0
        %1364 = vmatprep.subr.mxu0 0.0
        %1365 = vmatpush1.msra.mxu0 0.0
        %1366 = vmatprep.subr.mxu0 0.0
        %1367 = vmatpush1.msra.mxu0 0.0
        %1368 = vmatprep.subr.mxu0 0.0
        %1369 = vmatpush1.msra.mxu0 0.0
        %1370 = vmatprep.subr.mxu0 0.0
        %1371 = vmatpush1.msra.mxu0 0.0
        %1372 = vmatprep.subr.mxu0 0.0
        %1373 = vmatpush1.msra.mxu0 0.0
        %1374 = vmatprep.subr.mxu0 0.0
        %1375 = vmatpush1.msra.mxu0 0.0
        %1376 = vmatprep.subr.mxu0 0.0
        %1377 = vmatpush1.msra.mxu0 0.0
        %1378 = vmatprep.subr.mxu0 0.0
        %1379 = vmatpush1.msra.mxu0 0.0
        %1380 = vmatprep.subr.mxu0 0.0
        %1381 = vmatpush1.msra.mxu0 0.0
        %1382 = vmatprep.subr.mxu0 0.0
        %1383 = vmatpush1.msra.mxu0 0.0
        %1384 = vmatprep.subr.mxu0 0.0
        %1385 = vmatpush1.msra.mxu0 0.0
        %1386 = vmatprep.subr.mxu0 0.0
        %1387 = vmatpush1.msra.mxu0 0.0
        %1388 = vmatprep.subr.mxu0 0.0
        %1389 = vmatpush1.msra.mxu0 0.0
        %1390 = vmatprep.subr.mxu0 0.0
        %1391 = vmatpush1.msra.mxu0 0.0
        %1392 = vmatprep.subr.mxu0 0.0
        %1393 = vmatpush1.msra.mxu0 0.0
        %1394 = vmatprep.subr.mxu0 0.0
        %1395 = vmatpush1.msra.mxu0 0.0
        %1396 = vmatprep.subr.mxu0 0.0
        %1397 = vmatpush1.msra.mxu0 0.0
        %1398 = vmatprep.mubr.f32.mxu0 0.0
        %1399 = vmatmul.mubr.f32.gmra.mrb[0].mxu0 %v1332
        %v1400 = vpop.f32.mrb[0].mxu0
        %v1401 = vadd.f32 %v1324, %v1400
        %v1402 = vpop.f32.mrb[0].mxu0
        %v1403 = vadd.f32 %v1328, %v1402
        %1404 = vdwg.mxu0
        %1405 = vst [vmem:[%s595] sm:$0xff] %v1401
        %1406 = vst.msk [vmem:[%s595 + $0x8] sm:$0xff] %vm635, %v1403
        %s1407 = sand.u32 %s445, 1
        %s1408 = scalar_lea.sflag [#allocation3], %s1407
        %s1409 = sand.u32 %s445, 1
        %s1410 = smul.addr %s1409, 16
        %s1411 = scalar_lea.vmem [#allocation2], %s1410
        // Predicated region
        $region97: #{_ae1_forward_impl.1} parent=95 // pred_check
          %p1412 = pneg %p455
        $region98: #{_ae1_forward_impl.1} parent=95 // pred_check_branch
          %1414 = sbr.rel (%p1412) target = $region100
        $region99: #{_ae1_forward_impl.1} parent=95 // pred_region
          %s1416 = ssub.s32 256, 256
          %1417 = vsyncadd %s1408, %s1416
          %s1418 = smul.addr %s33, 2
          %s1419 = smul.addr %s1418, 128
          %s1420 = scalar_lea.hbm %s19, %s1419
          %s1422 = sshll.u32 %s1411, 4
          %s1423 = int_to_ptr.vmem [resolvable:$true] %s1422
          %1425 = dma.vmem_to_hbm [thread:$0]  %s1423, 256, %s1420, %s1408
        $region100: #{_ae1_forward_impl.1} parent=95 // pred_fallthru
          _
      $region96: #{_ae1_forward_impl.1} parent=5 // pred_fallthru
        _
      %p1426 = scmp.le.s32.totalorder 2, %s28
      // Predicated region
      $region101: #{_ae1_forward_impl.1} parent=5 // pred_check
        %p1427 = pneg %p1426
      $region102: #{_ae1_forward_impl.1} parent=5 // pred_check_branch
        %1429 = sbr.rel (%p1427) target = $region104
      $region103: #{_ae1_forward_impl.1} parent=5 // pred_region
        %s1430 = ssub.s32 %s28, 2
        // Predicated region
        $region105: #{_ae1_forward_impl.1} parent=103 // pred_check
          %p1431 = pneg %p461
        $region106: #{_ae1_forward_impl.1} parent=103 // pred_check_branch
          %1433 = sbr.rel (%p1431) target = $region108
        $region107: #{_ae1_forward_impl.1} parent=103 // pred_region
          %s1434 = sand.u32 %s446, 1
          %s1435 = scalar_lea.sflag [#allocation3], %s1434
          %s1436 = sand.u32 %s446, 1
          %s1437 = smul.addr %s1436, 16
          %s1438 = scalar_lea.vmem [#allocation2], %s1437
          %1439 = dma.done %s1435, 256
        $region108: #{_ae1_forward_impl.1} parent=103 // pred_fallthru
          _
      $region104: #{_ae1_forward_impl.1} parent=5 // pred_fallthru
        _
    $region6: #{_ae1_forward_impl.1} parent=1 // loop_footer
      %s32 = sadd.s32 1, %s28
    $region7: #{_ae1_forward_impl.1} parent=1 // loop_footer_branch
      %27 = sbr.rel target = $region3
    $region8: #{_ae1_forward_impl.1} parent=1 // loop_exit
      _
    %1440 = vsyncpa [#allocation3], 1
    %s1441 = scalar_lea.sflag [#allocation3], 1
    %1442 = vsyncpa %s1441, 1

</llo_original>
